<compile_context>
chip_gen: v6e
topology: v6e:2x2x1
jax: 0.10.0
libtpu: 0.0.40
codegen_flags: <defaults>
</compile_context>

<pallas_src>
import functools

import jax
import jax.numpy as jnp
from jax.experimental import pallas as pl
from jax.experimental.pallas import tpu as pltpu

# ----------------------- small, TPU-tile-friendly config -----------------------
VOCAB = 64
HIDDEN = 128
NUM_HEADS = 4
NUM_KV_HEADS = 2                      # GQA
HEAD_SIZE = HIDDEN // NUM_HEADS       # 32
INTERMEDIATE = 256
NUM_LAYERS = 2
EPS = 1e-5
ROPE_THETA = 10000.0
SEQ = 16
DTYPE = jnp.bfloat16                  # weight / IO / MXU operand dtype

QDIM = NUM_HEADS * HEAD_SIZE          # 128
KVDIM = NUM_KV_HEADS * HEAD_SIZE      # 64
KV_WIDTH = 2 * KVDIM                  # 128  (k | v concatenated, lane dense)
QKV_N = QDIM + 2 * KVDIM              # 256
FUSED_N = QKV_N + 2 * INTERMEDIATE    # 768  (q | kv | gate | up)
SOFTMAX_SCALE = HEAD_SIZE ** -0.5
NEG_INF = -1e30


# ------------------------------- in-kernel helpers ------------------------------
def _rope_pairwise(x, cos_t, sin_even_t, sin_odd_t):
    """Pairwise (GPT-J) rotation on the interleaved layout, select-free.

      out[2i]   = x[2i]   * cos_i - x[2i+1] * sin_i
      out[2i+1] = x[2i+1] * cos_i + x[2i]   * sin_i

    sin_even_t carries (-sin) on even lanes / 0 on odd lanes; sin_odd_t carries
    (+sin) on odd lanes / 0 on even lanes, so the two XLU lane rolls cover both
    partner directions and wraparound lanes are multiplied by 0.
    pltpu.roll(x, s)[j] = x[(j - s) % w].
    """
    w = x.shape[-1]
    nxt = pltpu.roll(x, shift=w - 1, axis=1)   # nxt[j] = x[(j + 1) % w]
    prv = pltpu.roll(x, shift=1, axis=1)       # prv[j] = x[(j - 1) % w]
    return x * cos_t + nxt * sin_even_t + prv * sin_odd_t


def _layernorm_f32(x, w, eps):
    # FastLayerNorm.load_no_bias / CohereLayerNorm math (f32):
    # (x - mean) * rsqrt(var + eps) * w
    mean = jnp.mean(x, axis=-1, keepdims=True)
    xm = x - mean
    var = jnp.mean(xm * xm, axis=-1, keepdims=True)
    return xm * jax.lax.rsqrt(var + eps) * w


# -------------------------------- fused kernel ----------------------------------
def _cohere_layer_stack_kernel(
    x_emb_ref, cos_q_ref, sin_e_q_ref, sin_o_q_ref,
    cos_kv_ref, sin_e_kv_ref, sin_o_kv_ref, mask_ref,
    ln_w_ref, w_fused_ref, wo_ref, wdown_ref, final_w_ref,
    out_ref,
    h_sc, res_sc, attn_sc,
    *, num_heads, num_kv_heads, head_size, intermediate, eps, compute_dtype,
):
    layer = pl.program_id(0)

    # ---- layer 0: load embeddings into the carried VMEM state ------------------
    @pl.when(layer == 0)
    def _():
        h_sc[...] = x_emb_ref[...].astype(jnp.float32)
        res_sc[...] = jnp.zeros_like(res_sc)   # residual=None for the first LN

    qdim = num_heads * head_size
    kvdim = num_kv_heads * head_size
    qkv_n = qdim + 2 * kvdim
    groups = num_heads // num_kv_heads

    # ---- FastLayerNorm.load_no_bias: res = x + residual ; normed = LN(res)*w ---
    res = h_sc[...] + res_sc[...]
    res_sc[...] = res
    normed = _layernorm_f32(res, ln_w_ref[...].astype(jnp.float32), eps)
    normed = normed.astype(compute_dtype)

    # ---- single fused projection: [ q | kv | gate | up ]  (one MXU matmul) -----
    proj = jnp.dot(normed, w_fused_ref[...], preferred_element_type=jnp.float32)
    q = proj[:, :qdim]                                   # (T, 128) lane aligned
    kv = proj[:, qdim:qkv_n]                             # (T, 128) k then v
    gate = proj[:, qkv_n:qkv_n + intermediate]           # (T, 256)
    up = proj[:, qkv_n + intermediate:qkv_n + 2 * intermediate]

    # ---- pairwise RoPE in f32 (softmax scale pre-folded into q tables) ---------
    q = _rope_pairwise(q, cos_q_ref[...], sin_e_q_ref[...], sin_o_q_ref[...])
    kv = _rope_pairwise(kv, cos_kv_ref[...], sin_e_kv_ref[...], sin_o_kv_ref[...])
    q_bf = q.astype(compute_dtype)      # bf16 operands for the attention MXU dots
    kv_bf = kv.astype(compute_dtype)

    # ---- causal GQA attention: bf16 operands, f32 accumulation -----------------
    mask = mask_ref[...]                # additive (T, T): 0 / -1e30
    for h in range(num_heads):          # unrolled at trace time
        g = h // groups                 # GQA kv-head mapping
        qh = q_bf[:, h * head_size:(h + 1) * head_size]
        kh = kv_bf[:, g * head_size:(g + 1) * head_size]
        vh = kv_bf[:, kvdim + g * head_size: kvdim + (g + 1) * head_size]
        s = jax.lax.dot_general(
            qh, kh, (((1,), (1,)), ((), ())),
            preferred_element_type=jnp.float32) + mask
        m = jnp.max(s, axis=-1, keepdims=True)
        p = jnp.exp(s - m)
        l = jnp.sum(p, axis=-1, keepdims=True)
        o = jnp.dot(p.astype(compute_dtype), vh,
                    preferred_element_type=jnp.float32)
        # write head output straight into the lane-dense (T, QDIM) scratch
        # (no jnp.concatenate over heads); pl.reciprocal -> EUP slot.
        attn_sc[:, h * head_size:(h + 1) * head_size] = (
            o * pl.reciprocal(l, approx=True)).astype(compute_dtype)

    attn_out = jnp.dot(attn_sc[...], wo_ref[...],
                       preferred_element_type=jnp.float32)          # o_proj

    # ---- CohereMLP (parallel branch): silu(gate) * up -> down_proj -------------
    act = (jax.nn.silu(gate) * up).astype(compute_dtype)
    mlp_out = jnp.dot(act, wdown_ref[...], preferred_element_type=jnp.float32)

    h_new = attn_out + mlp_out          # tp_world_size == 1 -> no all_reduce
    h_sc[...] = h_new

    # ---- final norm after the last layer ---------------------------------------
    @pl.when(layer == pl.num_programs(0) - 1)
    def _():
        final = _layernorm_f32(h_new + res,
                               final_w_ref[...].astype(jnp.float32), eps)
        out_ref[...] = final.astype(out_ref.dtype)


# ------------------------------- host-side glue ---------------------------------
def _rope_tables(position_ids):
    """PositionRotaryEmbedding.get_cos_sin + repeat_interleave, pre-tiled to the
    q / (k|v) lane widths. The even/odd pairwise sign+parity pattern and the
    softmax scale (q only) are baked in so the kernel does only roll + mul/add."""
    pos = position_ids.astype(jnp.float32)
    t = pos.shape[0]
    half = HEAD_SIZE // 2
    inv_freq = 1.0 / (
        ROPE_THETA ** (jnp.arange(0, HEAD_SIZE, 2, dtype=jnp.float32) / HEAD_SIZE)
    )
    freqs = pos[:, None] * inv_freq[None, :]                 # (T, half)
    cos = jnp.repeat(jnp.cos(freqs), 2, axis=-1)             # repeat_interleave
    sin = jnp.repeat(jnp.sin(freqs), 2, axis=-1)
    even = jnp.tile(jnp.array([1.0, 0.0], jnp.float32), (half,))   # 1 on even lanes
    odd = 1.0 - even
    sin_e = -sin * even[None, :]          # -sin on even lanes, 0 on odd
    sin_o = sin * odd[None, :]            # +sin on odd lanes, 0 on even

    # q lanes: tile across heads; fold the softmax scale in (q is scaled, so
    # s = q@k.T picks up exactly one factor of scale).
    cos_q = jnp.tile(cos, (1, NUM_HEADS)) * SOFTMAX_SCALE
    sin_e_q = jnp.tile(sin_e, (1, NUM_HEADS)) * SOFTMAX_SCALE
    sin_o_q = jnp.tile(sin_o, (1, NUM_HEADS)) * SOFTMAX_SCALE
    # k gets RoPE; v rides along untouched (cos=1, sin=0) so one 128-lane-wide
    # roll in-kernel covers the whole (k|v) slab.
    cos_kv = jnp.concatenate(
        [jnp.tile(cos, (1, NUM_KV_HEADS)), jnp.ones((t, KVDIM), jnp.float32)], axis=-1)
    sin_e_kv = jnp.concatenate(
        [jnp.tile(sin_e, (1, NUM_KV_HEADS)), jnp.zeros((t, KVDIM), jnp.float32)], axis=-1)
    sin_o_kv = jnp.concatenate(
        [jnp.tile(sin_o, (1, NUM_KV_HEADS)), jnp.zeros((t, KVDIM), jnp.float32)], axis=-1)
    return cos_q, sin_e_q, sin_o_q, cos_kv, sin_e_kv, sin_o_kv


def init_params(key):
    keys = jax.random.split(key, 1 + NUM_LAYERS)

    def w(k, shape, scale=0.02):
        return (scale * jax.random.normal(k, shape, dtype=jnp.float32)).astype(DTYPE)

    w_fused, wo, wdown = [], [], []
    for i in range(NUM_LAYERS):
        lk = jax.random.split(keys[1 + i], 5)
        wqkv = w(lk[0], (HIDDEN, QKV_N))            # fused q/k/v (col-linear, W.T)
        wgate = w(lk[2], (HIDDEN, INTERMEDIATE))
        wup = w(lk[3], (HIDDEN, INTERMEDIATE))
        # host-side fusion of all projections that consume `normed`
        w_fused.append(jnp.concatenate([wqkv, wgate, wup], axis=1))   # (H, 768)
        wo.append(w(lk[1], (QDIM, HIDDEN)))         # o_proj (row-linear, W.T)
        wdown.append(w(lk[4], (INTERMEDIATE, HIDDEN)))

    return {
        "embed": w(keys[0], (VOCAB, HIDDEN)),
        "ln": jnp.ones((NUM_LAYERS, 1, HIDDEN), jnp.float32),   # input_layernorm
        "final_ln": jnp.ones((1, HIDDEN), jnp.float32),         # model.norm
        "w_fused": jnp.stack(w_fused),   # (L, HIDDEN, FUSED_N)
        "wo": jnp.stack(wo),             # (L, QDIM, HIDDEN)
        "wdown": jnp.stack(wdown),       # (L, INTERMEDIATE, HIDDEN)
    }


def cohere_model_forward(params, input_ids, position_ids):
    T = input_ids.shape[0]
    x_emb = jnp.take(params["embed"], input_ids, axis=0)   # embed_tokens (glue gather)
    cos_q, sin_e_q, sin_o_q, cos_kv, sin_e_kv, sin_o_kv = _rope_tables(position_ids)
    # causal additive mask, hoisted out of the per-layer loop
    row = jnp.arange(T, dtype=jnp.int32)[:, None]
    col = jnp.arange(T, dtype=jnp.int32)[None, :]
    mask = jnp.where(col <= row, 0.0, NEG_INF).astype(jnp.float32)

    kernel = functools.partial(
        _cohere_layer_stack_kernel,
        num_heads=NUM_HEADS, num_kv_heads=NUM_KV_HEADS, head_size=HEAD_SIZE,
        intermediate=INTERMEDIATE, eps=EPS, compute_dtype=DTYPE)

    return pl.pallas_call(
        kernel,
        out_shape=jax.ShapeDtypeStruct((T, HIDDEN), DTYPE),
        grid=(NUM_LAYERS,),
        in_specs=[
            pl.BlockSpec((T, HIDDEN), lambda l: (0, 0)),                  # embeddings
            pl.BlockSpec((T, QDIM), lambda l: (0, 0)),                    # cos (q)
            pl.BlockSpec((T, QDIM), lambda l: (0, 0)),                    # sin even (q)
            pl.BlockSpec((T, QDIM), lambda l: (0, 0)),                    # sin odd  (q)
            pl.BlockSpec((T, KV_WIDTH), lambda l: (0, 0)),                # cos (k|v)
            pl.BlockSpec((T, KV_WIDTH), lambda l: (0, 0)),                # sin even (k|v)
            pl.BlockSpec((T, KV_WIDTH), lambda l: (0, 0)),                # sin odd  (k|v)
            pl.BlockSpec((T, T), lambda l: (0, 0)),                       # causal mask
            pl.BlockSpec((None, 1, HIDDEN), lambda l: (l, 0, 0)),         # input_layernorm
            pl.BlockSpec((None, HIDDEN, FUSED_N), lambda l: (l, 0, 0)),   # q|kv|gate|up
            pl.BlockSpec((None, QDIM, HIDDEN), lambda l: (l, 0, 0)),      # o_proj
            pl.BlockSpec((None, INTERMEDIATE, HIDDEN), lambda l: (l, 0, 0)),  # down_proj
            pl.BlockSpec((1, HIDDEN), lambda l: (0, 0)),                  # final norm w
        ],
        out_specs=pl.BlockSpec((T, HIDDEN), lambda l: (0, 0)),
        scratch_shapes=[
            pltpu.VMEM((T, HIDDEN), jnp.float32),   # hidden-state carry across layers
            pltpu.VMEM((T, HIDDEN), jnp.float32),   # residual carry across layers
            pltpu.VMEM((T, QDIM), DTYPE),           # per-head attention output slab
        ],
        compiler_params=pltpu.CompilerParams(
            # layers are a sequential carried recurrence -> arbitrary
            dimension_semantics=("arbitrary",),
        ),
    )(x_emb, cos_q, sin_e_q, sin_o_q, cos_kv, sin_e_kv, sin_o_kv, mask,
      params["ln"], params["w_fused"], params["wo"], params["wdown"],
      params["final_ln"])


if __name__ == "__main__":
    key = jax.random.PRNGKey(0)
    pkey, ikey = jax.random.split(key)
    params = init_params(pkey)
    input_ids = jax.random.randint(ikey, (SEQ,), 0, VOCAB, dtype=jnp.int32)
    position_ids = jnp.arange(SEQ, dtype=jnp.int32)

    out = jax.jit(cohere_model_forward)(params, input_ids, position_ids)
    jax.block_until_ready(out)
    assert out.shape == (SEQ, HIDDEN) and out.dtype == DTYPE
    assert bool(jnp.all(jnp.isfinite(out.astype(jnp.float32))))
    print("KERNEL_OK")
</pallas_src>

<mosaic_0001>
module attributes {stable_mosaic.version = 11 : i64} {
  func.func @_cohere_layer_stack_kernel(%arg0: i32, %arg1: memref<16x128xbf16, #tpu.memory_space<vmem>>, %arg2: memref<16x128xf32, #tpu.memory_space<vmem>>, %arg3: memref<16x128xf32, #tpu.memory_space<vmem>>, %arg4: memref<16x128xf32, #tpu.memory_space<vmem>>, %arg5: memref<16x128xf32, #tpu.memory_space<vmem>>, %arg6: memref<16x128xf32, #tpu.memory_space<vmem>>, %arg7: memref<16x128xf32, #tpu.memory_space<vmem>>, %arg8: memref<16x16xf32, #tpu.memory_space<vmem>>, %arg9: memref<1x1x128xf32, #tpu.memory_space<vmem>>, %arg10: memref<1x128x768xbf16, #tpu.memory_space<vmem>>, %arg11: memref<1x128x128xbf16, #tpu.memory_space<vmem>>, %arg12: memref<1x256x128xbf16, #tpu.memory_space<vmem>>, %arg13: memref<1x128xf32, #tpu.memory_space<vmem>>, %arg14: memref<16x128xbf16, #tpu.memory_space<vmem>>, %arg15: memref<16x128xf32, #tpu.memory_space<vmem>>, %arg16: memref<16x128xf32, #tpu.memory_space<vmem>>, %arg17: memref<16x128xbf16, #tpu.memory_space<vmem>>) attributes {dimension_semantics = [#tpu.dimension_semantics<arbitrary>], iteration_bounds = array<i64: 2>, scalar_prefetch = 0 : i64, scratch_operands = 3 : i64, tpu.core_type = #tpu.core_type<tc>, window_params = [{pipeline_mode = #tpu.pipeline_mode<synchronous>, transform_indices = @transform_0, window_bounds = array<i64: 16, 128>}, {pipeline_mode = #tpu.pipeline_mode<synchronous>, transform_indices = @transform_1, window_bounds = array<i64: 16, 128>}, {pipeline_mode = #tpu.pipeline_mode<synchronous>, transform_indices = @transform_2, window_bounds = array<i64: 16, 128>}, {pipeline_mode = #tpu.pipeline_mode<synchronous>, transform_indices = @transform_3, window_bounds = array<i64: 16, 128>}, {pipeline_mode = #tpu.pipeline_mode<synchronous>, transform_indices = @transform_4, window_bounds = array<i64: 16, 128>}, {pipeline_mode = #tpu.pipeline_mode<synchronous>, transform_indices = @transform_5, window_bounds = array<i64: 16, 128>}, {pipeline_mode = #tpu.pipeline_mode<synchronous>, transform_indices = @transform_6, window_bounds = array<i64: 16, 128>}, {pipeline_mode = #tpu.pipeline_mode<synchronous>, transform_indices = @transform_7, window_bounds = array<i64: 16, 16>}, {transform_indices = @transform_8, window_bounds = array<i64: 1, 1, 128>}, {transform_indices = @transform_9, window_bounds = array<i64: 1, 128, 768>}, {transform_indices = @transform_10, window_bounds = array<i64: 1, 128, 128>}, {transform_indices = @transform_11, window_bounds = array<i64: 1, 256, 128>}, {pipeline_mode = #tpu.pipeline_mode<synchronous>, transform_indices = @transform_12, window_bounds = array<i64: 1, 128>}, {pipeline_mode = #tpu.pipeline_mode<synchronous>, transform_indices = @transform_13, window_bounds = array<i64: 16, 128>}]} {
    %c0_i32 = arith.constant 0 : i32
    %0 = arith.cmpi eq, %arg0, %c0_i32 : i32
    %1 = arith.extui %0 : i1 to i32
    %c0_i32_0 = arith.constant 0 : i32
    %2 = arith.cmpi ne, %1, %c0_i32_0 : i32
    scf.if %2 {
      %c0_69 = arith.constant 0 : index
      %c0_70 = arith.constant 0 : index
      %154 = vector.load %arg1[%c0_69, %c0_70] : memref<16x128xbf16, #tpu.memory_space<vmem>>, vector<16x128xbf16>
      %155 = arith.extf %154 : vector<16x128xbf16> to vector<16x128xf32>
      %c0_71 = arith.constant 0 : index
      %c0_72 = arith.constant 0 : index
      %156 = vector.load %arg15[%c0_71, %c0_72] : memref<16x128xf32, #tpu.memory_space<vmem>>, vector<16x128xf32>
      tpu.vector_store %arg15[%c0_71, %c0_72], %155 {strides = array<i32>} : memref<16x128xf32, #tpu.memory_space<vmem>>, vector<16x128xf32>,
      %cst_73 = arith.constant 0.000000e+00 : f32
      %157 = vector.broadcast %cst_73 : f32 to vector<16x128xf32>
      %c0_74 = arith.constant 0 : index
      %c0_75 = arith.constant 0 : index
      %158 = vector.load %arg16[%c0_74, %c0_75] : memref<16x128xf32, #tpu.memory_space<vmem>>, vector<16x128xf32>
      tpu.vector_store %arg16[%c0_74, %c0_75], %157 {strides = array<i32>} : memref<16x128xf32, #tpu.memory_space<vmem>>, vector<16x128xf32>,
    } else {
    }
    %c0 = arith.constant 0 : index
    %c0_1 = arith.constant 0 : index
    %3 = vector.load %arg15[%c0, %c0_1] : memref<16x128xf32, #tpu.memory_space<vmem>>, vector<16x128xf32>
    %c0_2 = arith.constant 0 : index
    %c0_3 = arith.constant 0 : index
    %4 = vector.load %arg16[%c0_2, %c0_3] : memref<16x128xf32, #tpu.memory_space<vmem>>, vector<16x128xf32>
    %5 = arith.addf %3, %4 : vector<16x128xf32>
    %c0_4 = arith.constant 0 : index
    %c0_5 = arith.constant 0 : index
    %6 = vector.load %arg16[%c0_4, %c0_5] : memref<16x128xf32, #tpu.memory_space<vmem>>, vector<16x128xf32>
    tpu.vector_store %arg16[%c0_4, %c0_5], %5 {strides = array<i32>} : memref<16x128xf32, #tpu.memory_space<vmem>>, vector<16x128xf32>,
    %c0_6 = arith.constant 0 : index
    %c0_7 = arith.constant 0 : index
    %c0_8 = arith.constant 0 : index
    %7 = vector.load %arg9[%c0_6, %c0_7, %c0_8] : memref<1x1x128xf32, #tpu.memory_space<vmem>>, vector<1x1x128xf32>
    %8 = vector.shape_cast %7 : vector<1x1x128xf32> to vector<1x128xf32>
    %cst = arith.constant dense<0.000000e+00> : vector<16xf32>
    %9 = vector.multi_reduction <add>, %5, %cst [1] : vector<16x128xf32> to vector<16xf32>
    %10 = vector.shape_cast %9 : vector<16xf32> to vector<16x1xf32>
    %cst_9 = arith.constant 1.280000e+02 : f32
    %11 = vector.broadcast %cst_9 : f32 to vector<16x1xf32>
    %12 = arith.divf %10, %11 : vector<16x1xf32>
    %13 = vector.broadcast %12 : vector<16x1xf32> to vector<16x128xf32>
    %14 = arith.subf %5, %13 : vector<16x128xf32>
    %15 = arith.mulf %14, %14 : vector<16x128xf32>
    %cst_10 = arith.constant dense<0.000000e+00> : vector<16xf32>
    %16 = vector.multi_reduction <add>, %15, %cst_10 [1] : vector<16x128xf32> to vector<16xf32>
    %17 = vector.shape_cast %16 : vector<16xf32> to vector<16x1xf32>
    %cst_11 = arith.constant 1.280000e+02 : f32
    %18 = vector.broadcast %cst_11 : f32 to vector<16x1xf32>
    %19 = arith.divf %17, %18 : vector<16x1xf32>
    %cst_12 = arith.constant 9.99999974E-6 : f32
    %20 = vector.broadcast %cst_12 : f32 to vector<16x1xf32>
    %21 = arith.addf %19, %20 : vector<16x1xf32>
    %22 = math.rsqrt %21 : vector<16x1xf32>
    %23 = vector.broadcast %22 : vector<16x1xf32> to vector<16x128xf32>
    %24 = arith.mulf %14, %23 : vector<16x128xf32>
    %25 = vector.broadcast %8 : vector<1x128xf32> to vector<16x128xf32>
    %26 = arith.mulf %24, %25 : vector<16x128xf32>
    %27 = arith.truncf %26 : vector<16x128xf32> to vector<16x128xbf16>
    %c0_13 = arith.constant 0 : index
    %c0_14 = arith.constant 0 : index
    %c0_15 = arith.constant 0 : index
    %28 = vector.load %arg10[%c0_13, %c0_14, %c0_15] : memref<1x128x768xbf16, #tpu.memory_space<vmem>>, vector<1x128x768xbf16>
    %29 = vector.shape_cast %28 : vector<1x128x768xbf16> to vector<128x768xbf16>
    %cst_16 = arith.constant dense<0.000000e+00> : vector<16x768xf32>
    %30 = tpu.matmul %27, %29, %cst_16 {dimension_numbers = #tpu.dot_dimension_numbers<[1], [0], [0], [1], [0, 0, 1, 1], [], []>} : vector<16x128xbf16>, vector<128x768xbf16>, vector<16x768xf32> -> vector<16x768xf32>
    %31 = vector.extract_strided_slice %30 {offsets = [0, 0], sizes = [16, 128], strides = [1, 1]} : vector<16x768xf32> to vector<16x128xf32>
    %32 = vector.extract_strided_slice %30 {offsets = [0, 128], sizes = [16, 128], strides = [1, 1]} : vector<16x768xf32> to vector<16x128xf32>
    %33 = vector.extract_strided_slice %30 {offsets = [0, 256], sizes = [16, 256], strides = [1, 1]} : vector<16x768xf32> to vector<16x256xf32>
    %34 = vector.extract_strided_slice %30 {offsets = [0, 512], sizes = [16, 256], strides = [1, 1]} : vector<16x768xf32> to vector<16x256xf32>
    %c0_17 = arith.constant 0 : index
    %c0_18 = arith.constant 0 : index
    %35 = vector.load %arg2[%c0_17, %c0_18] : memref<16x128xf32, #tpu.memory_space<vmem>>, vector<16x128xf32>
    %c0_19 = arith.constant 0 : index
    %c0_20 = arith.constant 0 : index
    %36 = vector.load %arg3[%c0_19, %c0_20] : memref<16x128xf32, #tpu.memory_space<vmem>>, vector<16x128xf32>
    %c0_21 = arith.constant 0 : index
    %c0_22 = arith.constant 0 : index
    %37 = vector.load %arg4[%c0_21, %c0_22] : memref<16x128xf32, #tpu.memory_space<vmem>>, vector<16x128xf32>
    %c127_i32 = arith.constant 127 : i32
    %38 = tpu.dynamic_rotate %31 by %c127_i32 dim 1 : vector<16x128xf32>, i32 -> vector<16x128xf32>
    %c1_i32 = arith.constant 1 : i32
    %39 = tpu.dynamic_rotate %31 by %c1_i32 dim 1 : vector<16x128xf32>, i32 -> vector<16x128xf32>
    %40 = arith.mulf %31, %35 : vector<16x128xf32>
    %41 = arith.mulf %38, %36 : vector<16x128xf32>
    %42 = arith.addf %40, %41 : vector<16x128xf32>
    %43 = arith.mulf %39, %37 : vector<16x128xf32>
    %44 = arith.addf %42, %43 : vector<16x128xf32>
    %c0_23 = arith.constant 0 : index
    %c0_24 = arith.constant 0 : index
    %45 = vector.load %arg5[%c0_23, %c0_24] : memref<16x128xf32, #tpu.memory_space<vmem>>, vector<16x128xf32>
    %c0_25 = arith.constant 0 : index
    %c0_26 = arith.constant 0 : index
    %46 = vector.load %arg6[%c0_25, %c0_26] : memref<16x128xf32, #tpu.memory_space<vmem>>, vector<16x128xf32>
    %c0_27 = arith.constant 0 : index
    %c0_28 = arith.constant 0 : index
    %47 = vector.load %arg7[%c0_27, %c0_28] : memref<16x128xf32, #tpu.memory_space<vmem>>, vector<16x128xf32>
    %c127_i32_29 = arith.constant 127 : i32
    %48 = tpu.dynamic_rotate %32 by %c127_i32_29 dim 1 : vector<16x128xf32>, i32 -> vector<16x128xf32>
    %c1_i32_30 = arith.constant 1 : i32
    %49 = tpu.dynamic_rotate %32 by %c1_i32_30 dim 1 : vector<16x128xf32>, i32 -> vector<16x128xf32>
    %50 = arith.mulf %32, %45 : vector<16x128xf32>
    %51 = arith.mulf %48, %46 : vector<16x128xf32>
    %52 = arith.addf %50, %51 : vector<16x128xf32>
    %53 = arith.mulf %49, %47 : vector<16x128xf32>
    %54 = arith.addf %52, %53 : vector<16x128xf32>
    %55 = arith.truncf %44 : vector<16x128xf32> to vector<16x128xbf16>
    %56 = arith.truncf %54 : vector<16x128xf32> to vector<16x128xbf16>
    %c0_31 = arith.constant 0 : index
    %c0_32 = arith.constant 0 : index
    %57 = vector.load %arg8[%c0_31, %c0_32] : memref<16x16xf32, #tpu.memory_space<vmem>>, vector<16x16xf32>
    %58 = vector.extract_strided_slice %55 {offsets = [0, 0], sizes = [16, 32], strides = [1, 1]} : vector<16x128xbf16> to vector<16x32xbf16>
    %59 = vector.extract_strided_slice %56 {offsets = [0, 0], sizes = [16, 32], strides = [1, 1]} : vector<16x128xbf16> to vector<16x32xbf16>
    %60 = vector.extract_strided_slice %56 {offsets = [0, 64], sizes = [16, 32], strides = [1, 1]} : vector<16x128xbf16> to vector<16x32xbf16>
    %cst_33 = arith.constant dense<0.000000e+00> : vector<16x16xf32>
    %61 = tpu.matmul %58, %59, %cst_33 {dimension_numbers = #tpu.dot_dimension_numbers<[1], [1], [0], [0], [0, 0, 1, 0], [], []>} : vector<16x32xbf16>, vector<16x32xbf16>, vector<16x16xf32> -> vector<16x16xf32>
    %62 = arith.addf %61, %57 : vector<16x16xf32>
    %cst_34 = arith.constant dense<0xFF800000> : vector<16xf32>
    %63 = vector.multi_reduction <maximumf>, %62, %cst_34 [1] : vector<16x16xf32> to vector<16xf32>
    %64 = vector.shape_cast %63 : vector<16xf32> to vector<16x1xf32>
    %65 = vector.broadcast %64 : vector<16x1xf32> to vector<16x16xf32>
    %66 = arith.subf %62, %65 : vector<16x16xf32>
    %67 = math.exp %66 : vector<16x16xf32>
    %cst_35 = arith.constant dense<0.000000e+00> : vector<16xf32>
    %68 = vector.multi_reduction <add>, %67, %cst_35 [1] : vector<16x16xf32> to vector<16xf32>
    %69 = vector.shape_cast %68 : vector<16xf32> to vector<16x1xf32>
    %70 = arith.truncf %67 : vector<16x16xf32> to vector<16x16xbf16>
    %cst_36 = arith.constant dense<0.000000e+00> : vector<16x32xf32>
    %71 = tpu.matmul %70, %60, %cst_36 {dimension_numbers = #tpu.dot_dimension_numbers<[1], [0], [0], [1], [0, 0, 1, 1], [], []>} : vector<16x16xbf16>, vector<16x32xbf16>, vector<16x32xf32> -> vector<16x32xf32>
    %72 = tpu.reciprocal %69 {approx = true} : vector<16x1xf32> -> vector<16x1xf32>
    %73 = vector.broadcast %72 : vector<16x1xf32> to vector<16x32xf32>
    %74 = arith.mulf %71, %73 : vector<16x32xf32>
    %75 = arith.truncf %74 : vector<16x32xf32> to vector<16x32xbf16>
    %c0_37 = arith.constant 0 : index
    %c0_38 = arith.constant 0 : index
    %76 = vector.load %arg17[%c0_37, %c0_38] : memref<16x128xbf16, #tpu.memory_space<vmem>>, vector<16x32xbf16>
    tpu.vector_store %arg17[%c0_37, %c0_38], %75 {strides = array<i32>} : memref<16x128xbf16, #tpu.memory_space<vmem>>, vector<16x32xbf16>,
    %77 = vector.extract_strided_slice %55 {offsets = [0, 32], sizes = [16, 32], strides = [1, 1]} : vector<16x128xbf16> to vector<16x32xbf16>
    %78 = vector.extract_strided_slice %56 {offsets = [0, 0], sizes = [16, 32], strides = [1, 1]} : vector<16x128xbf16> to vector<16x32xbf16>
    %79 = vector.extract_strided_slice %56 {offsets = [0, 64], sizes = [16, 32], strides = [1, 1]} : vector<16x128xbf16> to vector<16x32xbf16>
    %cst_39 = arith.constant dense<0.000000e+00> : vector<16x16xf32>
    %80 = tpu.matmul %77, %78, %cst_39 {dimension_numbers = #tpu.dot_dimension_numbers<[1], [1], [0], [0], [0, 0, 1, 0], [], []>} : vector<16x32xbf16>, vector<16x32xbf16>, vector<16x16xf32> -> vector<16x16xf32>
    %81 = arith.addf %80, %57 : vector<16x16xf32>
    %cst_40 = arith.constant dense<0xFF800000> : vector<16xf32>
    %82 = vector.multi_reduction <maximumf>, %81, %cst_40 [1] : vector<16x16xf32> to vector<16xf32>
    %83 = vector.shape_cast %82 : vector<16xf32> to vector<16x1xf32>
    %84 = vector.broadcast %83 : vector<16x1xf32> to vector<16x16xf32>
    %85 = arith.subf %81, %84 : vector<16x16xf32>
    %86 = math.exp %85 : vector<16x16xf32>
    %cst_41 = arith.constant dense<0.000000e+00> : vector<16xf32>
    %87 = vector.multi_reduction <add>, %86, %cst_41 [1] : vector<16x16xf32> to vector<16xf32>
    %88 = vector.shape_cast %87 : vector<16xf32> to vector<16x1xf32>
    %89 = arith.truncf %86 : vector<16x16xf32> to vector<16x16xbf16>
    %cst_42 = arith.constant dense<0.000000e+00> : vector<16x32xf32>
    %90 = tpu.matmul %89, %79, %cst_42 {dimension_numbers = #tpu.dot_dimension_numbers<[1], [0], [0], [1], [0, 0, 1, 1], [], []>} : vector<16x16xbf16>, vector<16x32xbf16>, vector<16x32xf32> -> vector<16x32xf32>
    %91 = tpu.reciprocal %88 {approx = true} : vector<16x1xf32> -> vector<16x1xf32>
    %92 = vector.broadcast %91 : vector<16x1xf32> to vector<16x32xf32>
    %93 = arith.mulf %90, %92 : vector<16x32xf32>
    %94 = arith.truncf %93 : vector<16x32xf32> to vector<16x32xbf16>
    %c0_43 = arith.constant 0 : index
    %c32 = arith.constant 32 : index
    %95 = vector.load %arg17[%c0_43, %c32] : memref<16x128xbf16, #tpu.memory_space<vmem>>, vector<16x32xbf16>
    tpu.vector_store %arg17[%c0_43, %c32], %94 {strides = array<i32>} : memref<16x128xbf16, #tpu.memory_space<vmem>>, vector<16x32xbf16>,
    %96 = vector.extract_strided_slice %55 {offsets = [0, 64], sizes = [16, 32], strides = [1, 1]} : vector<16x128xbf16> to vector<16x32xbf16>
    %97 = vector.extract_strided_slice %56 {offsets = [0, 32], sizes = [16, 32], strides = [1, 1]} : vector<16x128xbf16> to vector<16x32xbf16>
    %98 = vector.extract_strided_slice %56 {offsets = [0, 96], sizes = [16, 32], strides = [1, 1]} : vector<16x128xbf16> to vector<16x32xbf16>
    %cst_44 = arith.constant dense<0.000000e+00> : vector<16x16xf32>
    %99 = tpu.matmul %96, %97, %cst_44 {dimension_numbers = #tpu.dot_dimension_numbers<[1], [1], [0], [0], [0, 0, 1, 0], [], []>} : vector<16x32xbf16>, vector<16x32xbf16>, vector<16x16xf32> -> vector<16x16xf32>
    %100 = arith.addf %99, %57 : vector<16x16xf32>
    %cst_45 = arith.constant dense<0xFF800000> : vector<16xf32>
    %101 = vector.multi_reduction <maximumf>, %100, %cst_45 [1] : vector<16x16xf32> to vector<16xf32>
    %102 = vector.shape_cast %101 : vector<16xf32> to vector<16x1xf32>
    %103 = vector.broadcast %102 : vector<16x1xf32> to vector<16x16xf32>
    %104 = arith.subf %100, %103 : vector<16x16xf32>
    %105 = math.exp %104 : vector<16x16xf32>
    %cst_46 = arith.constant dense<0.000000e+00> : vector<16xf32>
    %106 = vector.multi_reduction <add>, %105, %cst_46 [1] : vector<16x16xf32> to vector<16xf32>
    %107 = vector.shape_cast %106 : vector<16xf32> to vector<16x1xf32>
    %108 = arith.truncf %105 : vector<16x16xf32> to vector<16x16xbf16>
    %cst_47 = arith.constant dense<0.000000e+00> : vector<16x32xf32>
    %109 = tpu.matmul %108, %98, %cst_47 {dimension_numbers = #tpu.dot_dimension_numbers<[1], [0], [0], [1], [0, 0, 1, 1], [], []>} : vector<16x16xbf16>, vector<16x32xbf16>, vector<16x32xf32> -> vector<16x32xf32>
    %110 = tpu.reciprocal %107 {approx = true} : vector<16x1xf32> -> vector<16x1xf32>
    %111 = vector.broadcast %110 : vector<16x1xf32> to vector<16x32xf32>
    %112 = arith.mulf %109, %111 : vector<16x32xf32>
    %113 = arith.truncf %112 : vector<16x32xf32> to vector<16x32xbf16>
    %c0_48 = arith.constant 0 : index
    %c64 = arith.constant 64 : index
    %114 = vector.load %arg17[%c0_48, %c64] : memref<16x128xbf16, #tpu.memory_space<vmem>>, vector<16x32xbf16>
    tpu.vector_store %arg17[%c0_48, %c64], %113 {strides = array<i32>} : memref<16x128xbf16, #tpu.memory_space<vmem>>, vector<16x32xbf16>,
    %115 = vector.extract_strided_slice %55 {offsets = [0, 96], sizes = [16, 32], strides = [1, 1]} : vector<16x128xbf16> to vector<16x32xbf16>
    %116 = vector.extract_strided_slice %56 {offsets = [0, 32], sizes = [16, 32], strides = [1, 1]} : vector<16x128xbf16> to vector<16x32xbf16>
    %117 = vector.extract_strided_slice %56 {offsets = [0, 96], sizes = [16, 32], strides = [1, 1]} : vector<16x128xbf16> to vector<16x32xbf16>
    %cst_49 = arith.constant dense<0.000000e+00> : vector<16x16xf32>
    %118 = tpu.matmul %115, %116, %cst_49 {dimension_numbers = #tpu.dot_dimension_numbers<[1], [1], [0], [0], [0, 0, 1, 0], [], []>} : vector<16x32xbf16>, vector<16x32xbf16>, vector<16x16xf32> -> vector<16x16xf32>
    %119 = arith.addf %118, %57 : vector<16x16xf32>
    %cst_50 = arith.constant dense<0xFF800000> : vector<16xf32>
    %120 = vector.multi_reduction <maximumf>, %119, %cst_50 [1] : vector<16x16xf32> to vector<16xf32>
    %121 = vector.shape_cast %120 : vector<16xf32> to vector<16x1xf32>
    %122 = vector.broadcast %121 : vector<16x1xf32> to vector<16x16xf32>
    %123 = arith.subf %119, %122 : vector<16x16xf32>
    %124 = math.exp %123 : vector<16x16xf32>
    %cst_51 = arith.constant dense<0.000000e+00> : vector<16xf32>
    %125 = vector.multi_reduction <add>, %124, %cst_51 [1] : vector<16x16xf32> to vector<16xf32>
    %126 = vector.shape_cast %125 : vector<16xf32> to vector<16x1xf32>
    %127 = arith.truncf %124 : vector<16x16xf32> to vector<16x16xbf16>
    %cst_52 = arith.constant dense<0.000000e+00> : vector<16x32xf32>
    %128 = tpu.matmul %127, %117, %cst_52 {dimension_numbers = #tpu.dot_dimension_numbers<[1], [0], [0], [1], [0, 0, 1, 1], [], []>} : vector<16x16xbf16>, vector<16x32xbf16>, vector<16x32xf32> -> vector<16x32xf32>
    %129 = tpu.reciprocal %126 {approx = true} : vector<16x1xf32> -> vector<16x1xf32>
    %130 = vector.broadcast %129 : vector<16x1xf32> to vector<16x32xf32>
    %131 = arith.mulf %128, %130 : vector<16x32xf32>
    %132 = arith.truncf %131 : vector<16x32xf32> to vector<16x32xbf16>
    %c0_53 = arith.constant 0 : index
    %c96 = arith.constant 96 : index
    %133 = vector.load %arg17[%c0_53, %c96] : memref<16x128xbf16, #tpu.memory_space<vmem>>, vector<16x32xbf16>
    tpu.vector_store %arg17[%c0_53, %c96], %132 {strides = array<i32>} : memref<16x128xbf16, #tpu.memory_space<vmem>>, vector<16x32xbf16>,
    %c0_54 = arith.constant 0 : index
    %c0_55 = arith.constant 0 : index
    %134 = vector.load %arg17[%c0_54, %c0_55] : memref<16x128xbf16, #tpu.memory_space<vmem>>, vector<16x128xbf16>
    %c0_56 = arith.constant 0 : index
    %c0_57 = arith.constant 0 : index
    %c0_58 = arith.constant 0 : index
    %135 = vector.load %arg11[%c0_56, %c0_57, %c0_58] : memref<1x128x128xbf16, #tpu.memory_space<vmem>>, vector<1x128x128xbf16>
    %136 = vector.shape_cast %135 : vector<1x128x128xbf16> to vector<128x128xbf16>
    %cst_59 = arith.constant dense<0.000000e+00> : vector<16x128xf32>
    %137 = tpu.matmul %134, %136, %cst_59 {dimension_numbers = #tpu.dot_dimension_numbers<[1], [0], [0], [1], [0, 0, 1, 1], [], []>} : vector<16x128xbf16>, vector<128x128xbf16>, vector<16x128xf32> -> vector<16x128xf32>
    %138 = arith.negf %33 : vector<16x256xf32>
    %139 = math.exp %138 : vector<16x256xf32>
    %cst_60 = arith.constant 1.000000e+00 : f32
    %140 = vector.broadcast %cst_60 : f32 to vector<16x256xf32>
    %141 = arith.addf %140, %139 : vector<16x256xf32>
    %142 = arith.divf %140, %141 : vector<16x256xf32>
    %143 = arith.mulf %33, %142 : vector<16x256xf32>
    %144 = arith.mulf %143, %34 : vector<16x256xf32>
    %145 = arith.truncf %144 : vector<16x256xf32> to vector<16x256xbf16>
    %c0_61 = arith.constant 0 : index
    %c0_62 = arith.constant 0 : index
    %c0_63 = arith.constant 0 : index
    %146 = vector.load %arg12[%c0_61, %c0_62, %c0_63] : memref<1x256x128xbf16, #tpu.memory_space<vmem>>, vector<1x256x128xbf16>
    %147 = vector.shape_cast %146 : vector<1x256x128xbf16> to vector<256x128xbf16>
    %cst_64 = arith.constant dense<0.000000e+00> : vector<16x128xf32>
    %148 = tpu.matmul %145, %147, %cst_64 {dimension_numbers = #tpu.dot_dimension_numbers<[1], [0], [0], [1], [0, 0, 1, 1], [], []>} : vector<16x256xbf16>, vector<256x128xbf16>, vector<16x128xf32> -> vector<16x128xf32>
    %149 = arith.addf %137, %148 : vector<16x128xf32>
    %c0_65 = arith.constant 0 : index
    %c0_66 = arith.constant 0 : index
    %150 = vector.load %arg15[%c0_65, %c0_66] : memref<16x128xf32, #tpu.memory_space<vmem>>, vector<16x128xf32>
    tpu.vector_store %arg15[%c0_65, %c0_66], %149 {strides = array<i32>} : memref<16x128xf32, #tpu.memory_space<vmem>>, vector<16x128xf32>,
    %c1_i32_67 = arith.constant 1 : i32
    %151 = arith.cmpi eq, %arg0, %c1_i32_67 : i32
    %152 = arith.extui %151 : i1 to i32
    %c0_i32_68 = arith.constant 0 : i32
    %153 = arith.cmpi ne, %152, %c0_i32_68 : i32
    scf.if %153 {
      %154 = arith.addf %149, %5 : vector<16x128xf32>
      %c0_69 = arith.constant 0 : index
      %c0_70 = arith.constant 0 : index
      %155 = vector.load %arg13[%c0_69, %c0_70] : memref<1x128xf32, #tpu.memory_space<vmem>>, vector<1x128xf32>
      %cst_71 = arith.constant dense<0.000000e+00> : vector<16xf32>
      %156 = vector.multi_reduction <add>, %154, %cst_71 [1] : vector<16x128xf32> to vector<16xf32>
      %157 = vector.shape_cast %156 : vector<16xf32> to vector<16x1xf32>
      %cst_72 = arith.constant 1.280000e+02 : f32
      %158 = vector.broadcast %cst_72 : f32 to vector<16x1xf32>
      %159 = arith.divf %157, %158 : vector<16x1xf32>
      %160 = vector.broadcast %159 : vector<16x1xf32> to vector<16x128xf32>
      %161 = arith.subf %154, %160 : vector<16x128xf32>
      %162 = arith.mulf %161, %161 : vector<16x128xf32>
      %cst_73 = arith.constant dense<0.000000e+00> : vector<16xf32>
      %163 = vector.multi_reduction <add>, %162, %cst_73 [1] : vector<16x128xf32> to vector<16xf32>
      %164 = vector.shape_cast %163 : vector<16xf32> to vector<16x1xf32>
      %cst_74 = arith.constant 1.280000e+02 : f32
      %165 = vector.broadcast %cst_74 : f32 to vector<16x1xf32>
      %166 = arith.divf %164, %165 : vector<16x1xf32>
      %cst_75 = arith.constant 9.99999974E-6 : f32
      %167 = vector.broadcast %cst_75 : f32 to vector<16x1xf32>
      %168 = arith.addf %166, %167 : vector<16x1xf32>
      %169 = math.rsqrt %168 : vector<16x1xf32>
      %170 = vector.broadcast %169 : vector<16x1xf32> to vector<16x128xf32>
      %171 = arith.mulf %161, %170 : vector<16x128xf32>
      %172 = vector.broadcast %155 : vector<1x128xf32> to vector<16x128xf32>
      %173 = arith.mulf %171, %172 : vector<16x128xf32>
      %174 = arith.truncf %173 : vector<16x128xf32> to vector<16x128xbf16>
      %c0_76 = arith.constant 0 : index
      %c0_77 = arith.constant 0 : index
      %175 = vector.load %arg14[%c0_76, %c0_77] : memref<16x128xbf16, #tpu.memory_space<vmem>>, vector<16x128xbf16>
      tpu.vector_store %arg14[%c0_76, %c0_77], %174 {strides = array<i32>} : memref<16x128xbf16, #tpu.memory_space<vmem>>, vector<16x128xbf16>,
    } else {
    }
    return
  }
  func.func @transform_0(%arg0: i32) -> (i32, i32) {
    %c0_i32 = arith.constant 0 : i32
    %c0_i32_0 = arith.constant 0 : i32
    %c0_i32_1 = arith.constant 0 : i32
    return %c0_i32, %c0_i32_0 : i32, i32
  }
  func.func @transform_1(%arg0: i32) -> (i32, i32) {
    %c0_i32 = arith.constant 0 : i32
    %c0_i32_0 = arith.constant 0 : i32
    %c0_i32_1 = arith.constant 0 : i32
    return %c0_i32, %c0_i32_0 : i32, i32
  }
  func.func @transform_2(%arg0: i32) -> (i32, i32) {
    %c0_i32 = arith.constant 0 : i32
    %c0_i32_0 = arith.constant 0 : i32
    %c0_i32_1 = arith.constant 0 : i32
    return %c0_i32, %c0_i32_0 : i32, i32
  }
  func.func @transform_3(%arg0: i32) -> (i32, i32) {
    %c0_i32 = arith.constant 0 : i32
    %c0_i32_0 = arith.constant 0 : i32
    %c0_i32_1 = arith.constant 0 : i32
    return %c0_i32, %c0_i32_0 : i32, i32
  }
  func.func @transform_4(%arg0: i32) -> (i32, i32) {
    %c0_i32 = arith.constant 0 : i32
    %c0_i32_0 = arith.constant 0 : i32
    %c0_i32_1 = arith.constant 0 : i32
    return %c0_i32, %c0_i32_0 : i32, i32
  }
  func.func @transform_5(%arg0: i32) -> (i32, i32) {
    %c0_i32 = arith.constant 0 : i32
    %c0_i32_0 = arith.constant 0 : i32
    %c0_i32_1 = arith.constant 0 : i32
    return %c0_i32, %c0_i32_0 : i32, i32
  }
  func.func @transform_6(%arg0: i32) -> (i32, i32) {
    %c0_i32 = arith.constant 0 : i32
    %c0_i32_0 = arith.constant 0 : i32
    %c0_i32_1 = arith.constant 0 : i32
    return %c0_i32, %c0_i32_0 : i32, i32
  }
  func.func @transform_7(%arg0: i32) -> (i32, i32) {
    %c0_i32 = arith.constant 0 : i32
    %c0_i32_0 = arith.constant 0 : i32
    %c0_i32_1 = arith.constant 0 : i32
    return %c0_i32, %c0_i32_0 : i32, i32
  }
  func.func @transform_8(%arg0: i32) -> (i32, i32, i32) {
    %c0_i32 = arith.constant 0 : i32
    %c0_i32_0 = arith.constant 0 : i32
    %c0_i32_1 = arith.constant 0 : i32
    return %arg0, %c0_i32, %c0_i32_0 : i32, i32, i32
  }
  func.func @transform_9(%arg0: i32) -> (i32, i32, i32) {
    %c0_i32 = arith.constant 0 : i32
    %c0_i32_0 = arith.constant 0 : i32
    %c0_i32_1 = arith.constant 0 : i32
    return %arg0, %c0_i32, %c0_i32_0 : i32, i32, i32
  }
  func.func @transform_10(%arg0: i32) -> (i32, i32, i32) {
    %c0_i32 = arith.constant 0 : i32
    %c0_i32_0 = arith.constant 0 : i32
    %c0_i32_1 = arith.constant 0 : i32
    return %arg0, %c0_i32, %c0_i32_0 : i32, i32, i32
  }
  func.func @transform_11(%arg0: i32) -> (i32, i32, i32) {
    %c0_i32 = arith.constant 0 : i32
    %c0_i32_0 = arith.constant 0 : i32
    %c0_i32_1 = arith.constant 0 : i32
    return %arg0, %c0_i32, %c0_i32_0 : i32, i32, i32
  }
  func.func @transform_12(%arg0: i32) -> (i32, i32) {
    %c0_i32 = arith.constant 0 : i32
    %c0_i32_0 = arith.constant 0 : i32
    %c0_i32_1 = arith.constant 0 : i32
    return %c0_i32, %c0_i32_0 : i32, i32
  }
  func.func @transform_13(%arg0: i32) -> (i32, i32) {
    %c0_i32 = arith.constant 0 : i32
    %c0_i32_0 = arith.constant 0 : i32
    %c0_i32_1 = arith.constant 0 : i32
    return %c0_i32, %c0_i32_0 : i32, i32
  }
}

</mosaic_0001>

<llo_original>
// kernel: tile.35
$region0: #{tile.35}
  #allocation0 [shape = 's32[1]{0}', space=sflag, size = 0x4, scoped, tag = 'scoped memory for tile.35']
  %s0 = inlined_call_operand.vmem [shape: f32[2], index: 0, kind: input, shape index: {}]
  %s1 = inlined_call_operand.vmem [shape: f32[16,2], index: 1, kind: output, shape index: {}]
  // Predicated region
  $region2: #{tile.35} parent=0 // pred_check
    _
  $region3: #{tile.35} parent=0 // pred_check_branch
    %3 = sbr.rel (0) target = $region5
  $region4: #{tile.35} parent=0 // pred_region
    _
  $region5: #{tile.35} parent=0 // pred_fallthru
    _
  %v4 = vld [vmem:[%s0] ss:$0 sm:$0xff]
  %5 = vst [vmem:[%s1] sm:$0xff] %v4
  %s6 = scalar_lea.vmem %s1, 8
  %7 = vst [vmem:[%s6] sm:$0xff] %v4

// kernel: tile.60
$region0: #{tile.60}
  %s0 = inlined_call_operand.vmem [shape: f32[16,2,32], index: 0, kind: input, shape index: {}]
  %s1 = inlined_call_operand.vmem [shape: f32[16,64], index: 1, kind: output, shape index: {}]
  $region1: #{tile.60} parent=0
    #allocation0 [shape = 'u8[65536]{0}', space=vmem, size = 0x10000, scoped, tag = 'scoped mem for input reshape']
    %s3 = sshll.u32 1, 2
    %s4 = ssub.s32 %s3, 1
    %s5 = smul.addr 2, 15
    %s6 = scalar_lea.vmem %s0, %s5
    %v7 = vld [vmem:[%s6] sm:%s4]
    %s8 = scalar_lea.vmem [#allocation0], 120
    %9 = vst [vmem:[%s8] sm:%s4] %v7
    %s10 = smul.addr 2, 14
    %s11 = scalar_lea.vmem %s0, %s10
    %v12 = vld [vmem:[%s11] sm:%s4]
    %s13 = scalar_lea.vmem [#allocation0], 112
    %14 = vst [vmem:[%s13] sm:%s4] %v12
    %s15 = smul.addr 2, 13
    %s16 = scalar_lea.vmem %s0, %s15
    %v17 = vld [vmem:[%s16] sm:%s4]
    %s18 = scalar_lea.vmem [#allocation0], 104
    %19 = vst [vmem:[%s18] sm:%s4] %v17
    %s20 = smul.addr 2, 12
    %s21 = scalar_lea.vmem %s0, %s20
    %v22 = vld [vmem:[%s21] sm:%s4]
    %s23 = scalar_lea.vmem [#allocation0], 96
    %24 = vst [vmem:[%s23] sm:%s4] %v22
    %s25 = smul.addr 2, 11
    %s26 = scalar_lea.vmem %s0, %s25
    %v27 = vld [vmem:[%s26] sm:%s4]
    %s28 = scalar_lea.vmem [#allocation0], 88
    %29 = vst [vmem:[%s28] sm:%s4] %v27
    %s30 = smul.addr 2, 10
    %s31 = scalar_lea.vmem %s0, %s30
    %v32 = vld [vmem:[%s31] sm:%s4]
    %s33 = scalar_lea.vmem [#allocation0], 80
    %34 = vst [vmem:[%s33] sm:%s4] %v32
    %s35 = smul.addr 2, 9
    %s36 = scalar_lea.vmem %s0, %s35
    %v37 = vld [vmem:[%s36] sm:%s4]
    %s38 = scalar_lea.vmem [#allocation0], 72
    %39 = vst [vmem:[%s38] sm:%s4] %v37
    %s40 = smul.addr 2, 8
    %s41 = scalar_lea.vmem %s0, %s40
    %v42 = vld [vmem:[%s41] sm:%s4]
    %s43 = scalar_lea.vmem [#allocation0], 64
    %44 = vst [vmem:[%s43] sm:%s4] %v42
    %s45 = smul.addr 2, 7
    %s46 = scalar_lea.vmem %s0, %s45
    %v47 = vld [vmem:[%s46] sm:%s4]
    %s48 = scalar_lea.vmem [#allocation0], 56
    %49 = vst [vmem:[%s48] sm:%s4] %v47
    %s50 = smul.addr 2, 6
    %s51 = scalar_lea.vmem %s0, %s50
    %v52 = vld [vmem:[%s51] sm:%s4]
    %s53 = scalar_lea.vmem [#allocation0], 48
    %54 = vst [vmem:[%s53] sm:%s4] %v52
    %s55 = smul.addr 2, 5
    %s56 = scalar_lea.vmem %s0, %s55
    %v57 = vld [vmem:[%s56] sm:%s4]
    %s58 = scalar_lea.vmem [#allocation0], 40
    %59 = vst [vmem:[%s58] sm:%s4] %v57
    %s60 = smul.addr 2, 4
    %s61 = scalar_lea.vmem %s0, %s60
    %v62 = vld [vmem:[%s61] sm:%s4]
    %s63 = scalar_lea.vmem [#allocation0], 32
    %64 = vst [vmem:[%s63] sm:%s4] %v62
    %s65 = smul.addr 2, 3
    %s66 = scalar_lea.vmem %s0, %s65
    %v67 = vld [vmem:[%s66] sm:%s4]
    %s68 = scalar_lea.vmem [#allocation0], 24
    %69 = vst [vmem:[%s68] sm:%s4] %v67
    %s70 = smul.addr 2, 2
    %s71 = scalar_lea.vmem %s0, %s70
    %v72 = vld [vmem:[%s71] sm:%s4]
    %s73 = scalar_lea.vmem [#allocation0], 16
    %74 = vst [vmem:[%s73] sm:%s4] %v72
    %s75 = scalar_lea.vmem %s0, 2
    %v76 = vld [vmem:[%s75] sm:%s4]
    %s77 = scalar_lea.vmem [#allocation0], 8
    %78 = vst [vmem:[%s77] sm:%s4] %v76
    %v79 = vld [vmem:[%s0] sm:%s4]
    %80 = vst [vmem:[#allocation0] sm:%s4] %v79
    %v81 = vld [vmem:[#allocation0] ss:$8 sm:$0xf]
    %v82 = vld [vmem:[#allocation0] ss:$8 sm:$0xf0]
    %vm83 = vcmask 1047556
    %v84 = vsel %vm83, %v82, %v81
    %vm85 = vcmask 261120
    %86 = vst.msk [vmem:[%s1] sm:$0xff] %vm85, %v84
    %s87 = scalar_lea.vmem [#allocation0], 64
    %v88 = vld [vmem:[%s87] ss:$8 sm:$0xf]
    %s89 = scalar_lea.vmem [#allocation0], 64
    %v90 = vld [vmem:[%s89] ss:$8 sm:$0xf0]
    %vm91 = vcmask 1047556
    %v92 = vsel %vm91, %v90, %v88
    %vm93 = vcmask 261120
    %s94 = scalar_lea.vmem %s1, 8
    %95 = vst.msk [vmem:[%s94] sm:$0xff] %vm93, %v92
    %s96 = scalar_lea.vmem [#allocation0], 1
    %v97 = vld [vmem:[%s96] ss:$8 sm:$0xf]
    %s98 = scalar_lea.vmem [#allocation0], 1
    %v99 = vld [vmem:[%s98] ss:$8 sm:$0xf0]
    %vm100 = vcmask 1047556
    %v101 = vsel %vm100, %v99, %v97
    %102 = vrot.lane.b32.xlu0 %v101, 32
    %v103 = vpop.permute.xlu0 %102
    %vm104 = vcmask 523520
    %105 = vst.msk [vmem:[%s1] sm:$0xff] %vm104, %v103
    %s106 = scalar_lea.vmem [#allocation0], 65
    %v107 = vld [vmem:[%s106] ss:$8 sm:$0xf]
    %s108 = scalar_lea.vmem [#allocation0], 65
    %v109 = vld [vmem:[%s108] ss:$8 sm:$0xf0]
    %vm110 = vcmask 1047556
    %v111 = vsel %vm110, %v109, %v107
    %112 = vrot.lane.b32.xlu0 %v111, 32
    %v113 = vpop.permute.xlu0 %112
    %vm114 = vcmask 523520
    %s115 = scalar_lea.vmem %s1, 8
    %116 = vst.msk [vmem:[%s115] sm:$0xff] %vm114, %v113

// kernel: cohere_model_forward.1
$region0: #{cohere_model_forward.1}
  #allocation0 [shape = 'u32[]', space=smem, size = 0x4, offset = 0x4, fixed_abs, tag = 'smem constant byte address 0x4 - core index']
  #allocation1 [shape = 'u32[144,128]{1,0:T(1,128)}', space=vmem, size = 0x12000, scoped, tag = 'internal scratch']
  #allocation2 [shape = 'f32[16,128]{1,0:T(8,128)}', space=vmem, size = 0x2000, scoped, tag = 'scratch operand']
  #allocation3 [shape = 'f32[16,128]{1,0:T(8,128)}', space=vmem, size = 0x2000, scoped, tag = 'scratch operand']
  #allocation4 [shape = 'bf16[16,128]{1,0:T(8,128)(2,1)}', space=vmem, size = 0x1000, scoped, tag = 'scratch operand']
  %s0 = inlined_call_operand.vmem [shape: bf16[16,128], index: 0, kind: input, shape index: {}]
  %s1 = inlined_call_operand.vmem [shape: f32[16,128], index: 1, kind: input, shape index: {}]
  %s2 = inlined_call_operand.vmem [shape: f32[16,128], index: 2, kind: input, shape index: {}]
  %s3 = inlined_call_operand.vmem [shape: f32[16,128], index: 3, kind: input, shape index: {}]
  %s4 = inlined_call_operand.vmem [shape: f32[16,128], index: 4, kind: input, shape index: {}]
  %s5 = inlined_call_operand.vmem [shape: f32[16,128], index: 5, kind: input, shape index: {}]
  %s6 = inlined_call_operand.vmem [shape: f32[16,128], index: 6, kind: input, shape index: {}]
  %s7 = inlined_call_operand.vmem [shape: f32[16,16], index: 7, kind: input, shape index: {}]
  %s8 = inlined_call_operand.vmem [shape: f32[2,1,128], index: 8, kind: input, shape index: {}]
  %s9 = inlined_call_operand.vmem [shape: bf16[2,128,768], index: 9, kind: input, shape index: {}]
  %s10 = inlined_call_operand.vmem [shape: bf16[2,128,128], index: 10, kind: input, shape index: {}]
  %s11 = inlined_call_operand.vmem [shape: bf16[2,256,128], index: 11, kind: input, shape index: {}]
  %s12 = inlined_call_operand.vmem [shape: f32[1,128], index: 12, kind: input, shape index: {}]
  %s13 = inlined_call_operand.hbm [shape: bf16[16,128], index: 13, kind: output, shape index: {}]
  %s14 = sld [smem:[#allocation0]]
  $region93: #{cohere_model_forward.1} parent=0
    _
  %s16 = ssub.s32 1, %s14
  %s17 = scalar_select 0, %s16, %s14
  $region1: #{cohere_model_forward.1} parent=0
    #allocation5 [shape = 'u8[4096]{0}', space=vmem, size = 0x1000, scoped, tag = 'output window, operand 0, single buffered']
    #allocation6 [shape = 's32[2]{0}', space=sflag, size = 0x8, scoped, tag = 'scoped memory for cohere_model_forward.1']
    %18 = vsyncpa [#allocation6], 0
    loop: start=0, step=1, limit=4
    $region2: #{cohere_model_forward.1} parent=1 // loop_pre_header
      _
    $region3: #{cohere_model_forward.1} parent=1 // loop_header
      %s20 = sphi 0, %s24
      %p21 = scmp.ge.s32.totalorder %s20, 4
      %s28 = sphi 0, %s28
      %s30 = sphi 0, %s28
      %s31 = sphi 0, %s30
      %s45 = sphi 0, %s31
      %s49 = sphi 0, %s49
      %s51 = sphi 0, %s49
      %s52 = sphi 0, %s51
      %s66 = sphi 0, %s52
      %s70 = sphi 0, %s70
      %s72 = sphi 0, %s70
      %s73 = sphi 0, %s72
      %s87 = sphi 0, %s73
      %s91 = sphi 0, %s91
      %s93 = sphi 0, %s91
      %s94 = sphi 0, %s93
      %s108 = sphi 0, %s94
      %s112 = sphi 0, %s112
      %s114 = sphi 0, %s112
      %s115 = sphi 0, %s114
      %s129 = sphi 0, %s115
      %s133 = sphi 0, %s133
      %s135 = sphi 0, %s133
      %s136 = sphi 0, %s135
      %s150 = sphi 0, %s136
      %s154 = sphi 0, %s154
      %s156 = sphi 0, %s154
      %s157 = sphi 0, %s156
      %s171 = sphi 0, %s157
      %s175 = sphi 0, %s175
      %s177 = sphi 0, %s175
      %s178 = sphi 0, %s177
      %s192 = sphi 0, %s178
      %s198 = sphi 0, %s200
      %s201 = sphi 0, %s198
      %s202 = sphi 0, %s201
      %s218 = sphi 0, %s202
      %s224 = sphi 0, %s226
      %s227 = sphi 0, %s224
      %s228 = sphi 0, %s227
      %s244 = sphi 0, %s228
      %s250 = sphi 0, %s252
      %s253 = sphi 0, %s250
      %s254 = sphi 0, %s253
      %s270 = sphi 0, %s254
      %s276 = sphi 0, %s278
      %s279 = sphi 0, %s276
      %s280 = sphi 0, %s279
      %s296 = sphi 0, %s280
      %s300 = sphi 0, %s300
      %s302 = sphi 0, %s300
      %s303 = sphi 0, %s302
      %s317 = sphi 0, %s303
      %s321 = sphi 0, %s321
      %s323 = sphi 0, %s321
      %s324 = sphi 0, %s323
      %s338 = sphi 0, %s324
    $region4: #{cohere_model_forward.1} parent=1 // loop_header_branch
      %23 = sbr.rel (%p21) target = $region8
    $region5: #{cohere_model_forward.1} parent=1 // loop_body
      %s25 = ssub.s32 %s20, 1
      %s26 = ssub.s32 %s20, 2
      %s27 = sadd.s32 %s20, 1
      %s29 = sadd.s32 %s28, 1
      %p32 = scmp.eq.s32.totalorder %s20, 1
      %p33 = scmp.ne.s32.totalorder %s28, %s30
      %p34 = scmp.eq.s32.totalorder %s20, 0
      %p35 = por %p33, %p34
      %p36 = scmp.ne.s32.totalorder %s28, %s30
      %p37 = scmp.eq.s32.totalorder %s25, 1
      %p38 = por %p36, %p37
      %p39 = scmp.ne.s32.totalorder %s30, %s31
      %p40 = scmp.eq.s32.totalorder %s25, 0
      %p41 = por %p39, %p40
      %p42 = scmp.ne.s32.totalorder %s30, %s31
      %p43 = scmp.eq.s32.totalorder %s26, 1
      %p44 = por %p42, %p43
      %p46 = scmp.ne.s32.totalorder %s31, %s45
      %p47 = scmp.eq.s32.totalorder %s26, 0
      %p48 = por %p46, %p47
      %s50 = sadd.s32 %s49, 1
      %p53 = scmp.eq.s32.totalorder %s20, 1
      %p54 = scmp.ne.s32.totalorder %s49, %s51
      %p55 = scmp.eq.s32.totalorder %s20, 0
      %p56 = por %p54, %p55
      %p57 = scmp.ne.s32.totalorder %s49, %s51
      %p58 = scmp.eq.s32.totalorder %s25, 1
      %p59 = por %p57, %p58
      %p60 = scmp.ne.s32.totalorder %s51, %s52
      %p61 = scmp.eq.s32.totalorder %s25, 0
      %p62 = por %p60, %p61
      %p63 = scmp.ne.s32.totalorder %s51, %s52
      %p64 = scmp.eq.s32.totalorder %s26, 1
      %p65 = por %p63, %p64
      %p67 = scmp.ne.s32.totalorder %s52, %s66
      %p68 = scmp.eq.s32.totalorder %s26, 0
      %p69 = por %p67, %p68
      %s71 = sadd.s32 %s70, 1
      %p74 = scmp.eq.s32.totalorder %s20, 1
      %p75 = scmp.ne.s32.totalorder %s70, %s72
      %p76 = scmp.eq.s32.totalorder %s20, 0
      %p77 = por %p75, %p76
      %p78 = scmp.ne.s32.totalorder %s70, %s72
      %p79 = scmp.eq.s32.totalorder %s25, 1
      %p80 = por %p78, %p79
      %p81 = scmp.ne.s32.totalorder %s72, %s73
      %p82 = scmp.eq.s32.totalorder %s25, 0
      %p83 = por %p81, %p82
      %p84 = scmp.ne.s32.totalorder %s72, %s73
      %p85 = scmp.eq.s32.totalorder %s26, 1
      %p86 = por %p84, %p85
      %p88 = scmp.ne.s32.totalorder %s73, %s87
      %p89 = scmp.eq.s32.totalorder %s26, 0
      %p90 = por %p88, %p89
      %s92 = sadd.s32 %s91, 1
      %p95 = scmp.eq.s32.totalorder %s20, 1
      %p96 = scmp.ne.s32.totalorder %s91, %s93
      %p97 = scmp.eq.s32.totalorder %s20, 0
      %p98 = por %p96, %p97
      %p99 = scmp.ne.s32.totalorder %s91, %s93
      %p100 = scmp.eq.s32.totalorder %s25, 1
      %p101 = por %p99, %p100
      %p102 = scmp.ne.s32.totalorder %s93, %s94
      %p103 = scmp.eq.s32.totalorder %s25, 0
      %p104 = por %p102, %p103
      %p105 = scmp.ne.s32.totalorder %s93, %s94
      %p106 = scmp.eq.s32.totalorder %s26, 1
      %p107 = por %p105, %p106
      %p109 = scmp.ne.s32.totalorder %s94, %s108
      %p110 = scmp.eq.s32.totalorder %s26, 0
      %p111 = por %p109, %p110
      %s113 = sadd.s32 %s112, 1
      %p116 = scmp.eq.s32.totalorder %s20, 1
      %p117 = scmp.ne.s32.totalorder %s112, %s114
      %p118 = scmp.eq.s32.totalorder %s20, 0
      %p119 = por %p117, %p118
      %p120 = scmp.ne.s32.totalorder %s112, %s114
      %p121 = scmp.eq.s32.totalorder %s25, 1
      %p122 = por %p120, %p121
      %p123 = scmp.ne.s32.totalorder %s114, %s115
      %p124 = scmp.eq.s32.totalorder %s25, 0
      %p125 = por %p123, %p124
      %p126 = scmp.ne.s32.totalorder %s114, %s115
      %p127 = scmp.eq.s32.totalorder %s26, 1
      %p128 = por %p126, %p127
      %p130 = scmp.ne.s32.totalorder %s115, %s129
      %p131 = scmp.eq.s32.totalorder %s26, 0
      %p132 = por %p130, %p131
      %s134 = sadd.s32 %s133, 1
      %p137 = scmp.eq.s32.totalorder %s20, 1
      %p138 = scmp.ne.s32.totalorder %s133, %s135
      %p139 = scmp.eq.s32.totalorder %s20, 0
      %p140 = por %p138, %p139
      %p141 = scmp.ne.s32.totalorder %s133, %s135
      %p142 = scmp.eq.s32.totalorder %s25, 1
      %p143 = por %p141, %p142
      %p144 = scmp.ne.s32.totalorder %s135, %s136
      %p145 = scmp.eq.s32.totalorder %s25, 0
      %p146 = por %p144, %p145
      %p147 = scmp.ne.s32.totalorder %s135, %s136
      %p148 = scmp.eq.s32.totalorder %s26, 1
      %p149 = por %p147, %p148
      %p151 = scmp.ne.s32.totalorder %s136, %s150
      %p152 = scmp.eq.s32.totalorder %s26, 0
      %p153 = por %p151, %p152
      %s155 = sadd.s32 %s154, 1
      %p158 = scmp.eq.s32.totalorder %s20, 1
      %p159 = scmp.ne.s32.totalorder %s154, %s156
      %p160 = scmp.eq.s32.totalorder %s20, 0
      %p161 = por %p159, %p160
      %p162 = scmp.ne.s32.totalorder %s154, %s156
      %p163 = scmp.eq.s32.totalorder %s25, 1
      %p164 = por %p162, %p163
      %p165 = scmp.ne.s32.totalorder %s156, %s157
      %p166 = scmp.eq.s32.totalorder %s25, 0
      %p167 = por %p165, %p166
      %p168 = scmp.ne.s32.totalorder %s156, %s157
      %p169 = scmp.eq.s32.totalorder %s26, 1
      %p170 = por %p168, %p169
      %p172 = scmp.ne.s32.totalorder %s157, %s171
      %p173 = scmp.eq.s32.totalorder %s26, 0
      %p174 = por %p172, %p173
      %s176 = sadd.s32 %s175, 1
      %p179 = scmp.eq.s32.totalorder %s20, 1
      %p180 = scmp.ne.s32.totalorder %s175, %s177
      %p181 = scmp.eq.s32.totalorder %s20, 0
      %p182 = por %p180, %p181
      %p183 = scmp.ne.s32.totalorder %s175, %s177
      %p184 = scmp.eq.s32.totalorder %s25, 1
      %p185 = por %p183, %p184
      %p186 = scmp.ne.s32.totalorder %s177, %s178
      %p187 = scmp.eq.s32.totalorder %s25, 0
      %p188 = por %p186, %p187
      %p189 = scmp.ne.s32.totalorder %s177, %s178
      %p190 = scmp.eq.s32.totalorder %s26, 1
      %p191 = por %p189, %p190
      %p193 = scmp.ne.s32.totalorder %s178, %s192
      %p194 = scmp.eq.s32.totalorder %s26, 0
      %p195 = por %p193, %p194
      %s196 = ssub.s32 %s20, %s27
      %p197 = scmp.eq.s32.totalorder %s196, 0
      %s199 = sadd.s32 %s198, 1
      %s200 = scalar_select %p197, %s198, %s199
      %p203 = pneg %p197
      %p204 = scmp.eq.s32.totalorder %s20, 1
      %p205 = por %p203, %p204
      %p206 = scmp.ne.s32.totalorder %s198, %s201
      %p207 = scmp.eq.s32.totalorder %s20, 0
      %p208 = por %p206, %p207
      %p209 = scmp.ne.s32.totalorder %s198, %s201
      %p210 = scmp.eq.s32.totalorder %s25, 1
      %p211 = por %p209, %p210
      %p212 = scmp.ne.s32.totalorder %s201, %s202
      %p213 = scmp.eq.s32.totalorder %s25, 0
      %p214 = por %p212, %p213
      %p215 = scmp.ne.s32.totalorder %s201, %s202
      %p216 = scmp.eq.s32.totalorder %s26, 1
      %p217 = por %p215, %p216
      %p219 = scmp.ne.s32.totalorder %s202, %s218
      %p220 = scmp.eq.s32.totalorder %s26, 0
      %p221 = por %p219, %p220
      %s222 = ssub.s32 %s20, %s27
      %p223 = scmp.eq.s32.totalorder %s222, 0
      %s225 = sadd.s32 %s224, 1
      %s226 = scalar_select %p223, %s224, %s225
      %p229 = pneg %p223
      %p230 = scmp.eq.s32.totalorder %s20, 1
      %p231 = por %p229, %p230
      %p232 = scmp.ne.s32.totalorder %s224, %s227
      %p233 = scmp.eq.s32.totalorder %s20, 0
      %p234 = por %p232, %p233
      %p235 = scmp.ne.s32.totalorder %s224, %s227
      %p236 = scmp.eq.s32.totalorder %s25, 1
      %p237 = por %p235, %p236
      %p238 = scmp.ne.s32.totalorder %s227, %s228
      %p239 = scmp.eq.s32.totalorder %s25, 0
      %p240 = por %p238, %p239
      %p241 = scmp.ne.s32.totalorder %s227, %s228
      %p242 = scmp.eq.s32.totalorder %s26, 1
      %p243 = por %p241, %p242
      %p245 = scmp.ne.s32.totalorder %s228, %s244
      %p246 = scmp.eq.s32.totalorder %s26, 0
      %p247 = por %p245, %p246
      %s248 = ssub.s32 %s20, %s27
      %p249 = scmp.eq.s32.totalorder %s248, 0
      %s251 = sadd.s32 %s250, 1
      %s252 = scalar_select %p249, %s250, %s251
      %p255 = pneg %p249
      %p256 = scmp.eq.s32.totalorder %s20, 1
      %p257 = por %p255, %p256
      %p258 = scmp.ne.s32.totalorder %s250, %s253
      %p259 = scmp.eq.s32.totalorder %s20, 0
      %p260 = por %p258, %p259
      %p261 = scmp.ne.s32.totalorder %s250, %s253
      %p262 = scmp.eq.s32.totalorder %s25, 1
      %p263 = por %p261, %p262
      %p264 = scmp.ne.s32.totalorder %s253, %s254
      %p265 = scmp.eq.s32.totalorder %s25, 0
      %p266 = por %p264, %p265
      %p267 = scmp.ne.s32.totalorder %s253, %s254
      %p268 = scmp.eq.s32.totalorder %s26, 1
      %p269 = por %p267, %p268
      %p271 = scmp.ne.s32.totalorder %s254, %s270
      %p272 = scmp.eq.s32.totalorder %s26, 0
      %p273 = por %p271, %p272
      %s274 = ssub.s32 %s20, %s27
      %p275 = scmp.eq.s32.totalorder %s274, 0
      %s277 = sadd.s32 %s276, 1
      %s278 = scalar_select %p275, %s276, %s277
      %p281 = pneg %p275
      %p282 = scmp.eq.s32.totalorder %s20, 1
      %p283 = por %p281, %p282
      %p284 = scmp.ne.s32.totalorder %s276, %s279
      %p285 = scmp.eq.s32.totalorder %s20, 0
      %p286 = por %p284, %p285
      %p287 = scmp.ne.s32.totalorder %s276, %s279
      %p288 = scmp.eq.s32.totalorder %s25, 1
      %p289 = por %p287, %p288
      %p290 = scmp.ne.s32.totalorder %s279, %s280
      %p291 = scmp.eq.s32.totalorder %s25, 0
      %p292 = por %p290, %p291
      %p293 = scmp.ne.s32.totalorder %s279, %s280
      %p294 = scmp.eq.s32.totalorder %s26, 1
      %p295 = por %p293, %p294
      %p297 = scmp.ne.s32.totalorder %s280, %s296
      %p298 = scmp.eq.s32.totalorder %s26, 0
      %p299 = por %p297, %p298
      %s301 = sadd.s32 %s300, 1
      %p304 = scmp.eq.s32.totalorder %s20, 1
      %p305 = scmp.ne.s32.totalorder %s300, %s302
      %p306 = scmp.eq.s32.totalorder %s20, 0
      %p307 = por %p305, %p306
      %p308 = scmp.ne.s32.totalorder %s300, %s302
      %p309 = scmp.eq.s32.totalorder %s25, 1
      %p310 = por %p308, %p309
      %p311 = scmp.ne.s32.totalorder %s302, %s303
      %p312 = scmp.eq.s32.totalorder %s25, 0
      %p313 = por %p311, %p312
      %p314 = scmp.ne.s32.totalorder %s302, %s303
      %p315 = scmp.eq.s32.totalorder %s26, 1
      %p316 = por %p314, %p315
      %p318 = scmp.ne.s32.totalorder %s303, %s317
      %p319 = scmp.eq.s32.totalorder %s26, 0
      %p320 = por %p318, %p319
      %s322 = sadd.s32 %s321, 1
      %p325 = scmp.eq.s32.totalorder %s20, 1
      %p326 = scmp.ne.s32.totalorder %s321, %s323
      %p327 = scmp.eq.s32.totalorder %s20, 0
      %p328 = por %p326, %p327
      %p329 = scmp.ne.s32.totalorder %s321, %s323
      %p330 = scmp.eq.s32.totalorder %s25, 1
      %p331 = por %p329, %p330
      %p332 = scmp.ne.s32.totalorder %s323, %s324
      %p333 = scmp.eq.s32.totalorder %s25, 0
      %p334 = por %p332, %p333
      %p335 = scmp.ne.s32.totalorder %s323, %s324
      %p336 = scmp.eq.s32.totalorder %s26, 1
      %p337 = por %p335, %p336
      %p339 = scmp.ne.s32.totalorder %s324, %s338
      %p340 = scmp.eq.s32.totalorder %s26, 0
      %p341 = por %p339, %p340
      %p342 = scmp.le.s32.totalorder 1, %s20
      %p343 = scmp.lt.s32.totalorder %s20, 3
      %p344 = pnand %p342, %p343
      %p345 = pneg %p344
      // Predicated region
      $region9: #{cohere_model_forward.1} parent=5 // pred_check
        _
      $region10: #{cohere_model_forward.1} parent=5 // pred_check_branch
        %347 = sbr.rel (%p344) target = $region12
      $region11: #{cohere_model_forward.1} parent=5 // pred_region
        %s348 = ssub.s32 %s20, 1
        // Predicated region
        $region13: #{cohere_model_forward.1} parent=11 // pred_check
          %p349 = pneg %p41
        $region14: #{cohere_model_forward.1} parent=11 // pred_check_branch
          %351 = sbr.rel (%p349) target = $region16
        $region15: #{cohere_model_forward.1} parent=11 // pred_region
          _
        $region16: #{cohere_model_forward.1} parent=11 // pred_fallthru
          _
        // Predicated region
        $region17: #{cohere_model_forward.1} parent=11 // pred_check
          %p352 = pneg %p62
        $region18: #{cohere_model_forward.1} parent=11 // pred_check_branch
          %354 = sbr.rel (%p352) target = $region20
        $region19: #{cohere_model_forward.1} parent=11 // pred_region
          _
        $region20: #{cohere_model_forward.1} parent=11 // pred_fallthru
          _
        // Predicated region
        $region21: #{cohere_model_forward.1} parent=11 // pred_check
          %p355 = pneg %p83
        $region22: #{cohere_model_forward.1} parent=11 // pred_check_branch
          %357 = sbr.rel (%p355) target = $region24
        $region23: #{cohere_model_forward.1} parent=11 // pred_region
          _
        $region24: #{cohere_model_forward.1} parent=11 // pred_fallthru
          _
        // Predicated region
        $region25: #{cohere_model_forward.1} parent=11 // pred_check
          %p358 = pneg %p104
        $region26: #{cohere_model_forward.1} parent=11 // pred_check_branch
          %360 = sbr.rel (%p358) target = $region28
        $region27: #{cohere_model_forward.1} parent=11 // pred_region
          _
        $region28: #{cohere_model_forward.1} parent=11 // pred_fallthru
          _
        // Predicated region
        $region29: #{cohere_model_forward.1} parent=11 // pred_check
          %p361 = pneg %p125
        $region30: #{cohere_model_forward.1} parent=11 // pred_check_branch
          %363 = sbr.rel (%p361) target = $region32
        $region31: #{cohere_model_forward.1} parent=11 // pred_region
          _
        $region32: #{cohere_model_forward.1} parent=11 // pred_fallthru
          _
        // Predicated region
        $region33: #{cohere_model_forward.1} parent=11 // pred_check
          %p364 = pneg %p146
        $region34: #{cohere_model_forward.1} parent=11 // pred_check_branch
          %366 = sbr.rel (%p364) target = $region36
        $region35: #{cohere_model_forward.1} parent=11 // pred_region
          _
        $region36: #{cohere_model_forward.1} parent=11 // pred_fallthru
          _
        // Predicated region
        $region37: #{cohere_model_forward.1} parent=11 // pred_check
          %p367 = pneg %p167
        $region38: #{cohere_model_forward.1} parent=11 // pred_check_branch
          %369 = sbr.rel (%p367) target = $region40
        $region39: #{cohere_model_forward.1} parent=11 // pred_region
          _
        $region40: #{cohere_model_forward.1} parent=11 // pred_fallthru
          _
        // Predicated region
        $region41: #{cohere_model_forward.1} parent=11 // pred_check
          %p370 = pneg %p188
        $region42: #{cohere_model_forward.1} parent=11 // pred_check_branch
          %372 = sbr.rel (%p370) target = $region44
        $region43: #{cohere_model_forward.1} parent=11 // pred_region
          _
        $region44: #{cohere_model_forward.1} parent=11 // pred_fallthru
          _
        // Predicated region
        $region45: #{cohere_model_forward.1} parent=11 // pred_check
          %p373 = pneg %p313
        $region46: #{cohere_model_forward.1} parent=11 // pred_check_branch
          %375 = sbr.rel (%p373) target = $region48
        $region47: #{cohere_model_forward.1} parent=11 // pred_region
          _
        $region48: #{cohere_model_forward.1} parent=11 // pred_fallthru
          _
      $region12: #{cohere_model_forward.1} parent=5 // pred_fallthru
        _
      %p376 = scmp.lt.s32.totalorder %s20, 2
      // Predicated region
      $region49: #{cohere_model_forward.1} parent=5 // pred_check
        %p377 = pneg %p376
      $region50: #{cohere_model_forward.1} parent=5 // pred_check_branch
        %379 = sbr.rel (%p377) target = $region52
      $region51: #{cohere_model_forward.1} parent=5 // pred_region
        // Predicated region
        $region53: #{cohere_model_forward.1} parent=51 // pred_check
          %p380 = pneg %p208
        $region54: #{cohere_model_forward.1} parent=51 // pred_check_branch
          %382 = sbr.rel (%p380) target = $region56
        $region55: #{cohere_model_forward.1} parent=51 // pred_region
          %p383 = scmp.lt.s32.totalorder %s20, 1
          %s384 = scalar_select %p383, %s20, 1
          %s385 = scalar_lea.vmem %s8, %s384
        $region56: #{cohere_model_forward.1} parent=51 // pred_fallthru
          _
        // Predicated region
        $region57: #{cohere_model_forward.1} parent=51 // pred_check
          %p386 = pneg %p234
        $region58: #{cohere_model_forward.1} parent=51 // pred_check_branch
          %388 = sbr.rel (%p386) target = $region60
        $region59: #{cohere_model_forward.1} parent=51 // pred_region
          %p389 = scmp.lt.s32.totalorder %s20, 1
          %s390 = scalar_select %p389, %s20, 1
          %s391 = smul.addr %s390, 96
          %s392 = smul.addr %s391, 4
          %s393 = scalar_lea.vmem %s9, %s392
        $region60: #{cohere_model_forward.1} parent=51 // pred_fallthru
          _
        // Predicated region
        $region61: #{cohere_model_forward.1} parent=51 // pred_check
          %p394 = pneg %p260
        $region62: #{cohere_model_forward.1} parent=51 // pred_check_branch
          %396 = sbr.rel (%p394) target = $region64
        $region63: #{cohere_model_forward.1} parent=51 // pred_region
          %p397 = scmp.lt.s32.totalorder %s20, 1
          %s398 = scalar_select %p397, %s20, 1
          %s399 = smul.addr %s398, 16
          %s400 = smul.addr %s399, 4
          %s401 = scalar_lea.vmem %s10, %s400
        $region64: #{cohere_model_forward.1} parent=51 // pred_fallthru
          _
        // Predicated region
        $region65: #{cohere_model_forward.1} parent=51 // pred_check
          %p402 = pneg %p286
        $region66: #{cohere_model_forward.1} parent=51 // pred_check_branch
          %404 = sbr.rel (%p402) target = $region68
        $region67: #{cohere_model_forward.1} parent=51 // pred_region
          %p405 = scmp.lt.s32.totalorder %s20, 1
          %s406 = scalar_select %p405, %s20, 1
          %s407 = smul.addr %s406, 32
          %s408 = smul.addr %s407, 4
          %s409 = scalar_lea.vmem %s11, %s408
        $region68: #{cohere_model_forward.1} parent=51 // pred_fallthru
          _
      $region52: #{cohere_model_forward.1} parent=5 // pred_fallthru
        _
      %p410 = scmp.le.s32.totalorder 1, %s20
      %p411 = scmp.lt.s32.totalorder %s20, 3
      %p412 = pnand %p410, %p411
      %p413 = pneg %p412
      // Predicated region
      $region69: #{cohere_model_forward.1} parent=5 // pred_check
        _
      $region70: #{cohere_model_forward.1} parent=5 // pred_check_branch
        %415 = sbr.rel (%p412) target = $region72
      $region71: #{cohere_model_forward.1} parent=5 // pred_region
        %s416 = ssub.s32 %s20, 1
        %p417 = pneg %p41
        %p418 = pneg %p38
        %p419 = pneg %p62
        %p420 = pneg %p59
        %p421 = pneg %p83
        %p422 = pneg %p80
        %p423 = pneg %p104
        %p424 = pneg %p101
        %p425 = pneg %p125
        %p426 = pneg %p122
        %p427 = pneg %p146
        %p428 = pneg %p143
        %p429 = pneg %p167
        %p430 = pneg %p164
        %p431 = pneg %p188
        %p432 = pneg %p185
        %p433 = scmp.lt.s32.totalorder %s25, 1
        %s434 = scalar_select %p433, %s25, 1
        %s435 = scalar_lea.vmem %s8, %s434
        %p436 = pneg %p214
        %p437 = pneg %p211
        %p438 = scmp.lt.s32.totalorder %s25, 1
        %s439 = scalar_select %p438, %s25, 1
        %s440 = smul.addr %s439, 96
        %s441 = smul.addr %s440, 4
        %s442 = scalar_lea.vmem %s9, %s441
        %p443 = pneg %p240
        %p444 = pneg %p237
        %p445 = scmp.lt.s32.totalorder %s25, 1
        %s446 = scalar_select %p445, %s25, 1
        %s447 = smul.addr %s446, 16
        %s448 = smul.addr %s447, 4
        %s449 = scalar_lea.vmem %s10, %s448
        %p450 = pneg %p266
        %p451 = pneg %p263
        %p452 = scmp.lt.s32.totalorder %s25, 1
        %s453 = scalar_select %p452, %s25, 1
        %s454 = smul.addr %s453, 32
        %s455 = smul.addr %s454, 4
        %s456 = scalar_lea.vmem %s11, %s455
        %p457 = pneg %p292
        %p458 = pneg %p289
        %p459 = pneg %p313
        %p460 = pneg %p310
        %p461 = pneg %p334
        %p462 = pneg %p331
        %p463 = scmp.lt.s32.totalorder %s25, 1
        %s464 = scalar_select %p463, %s25, 1
        %s465 = scalar_lea.vmem %s8, %s464
        %p466 = scmp.lt.s32.totalorder %s25, 1
        %s467 = scalar_select %p466, %s25, 1
        %s468 = smul.addr %s467, 96
        %s469 = smul.addr %s468, 4
        %s470 = scalar_lea.vmem %s9, %s469
        %p471 = scmp.lt.s32.totalorder %s25, 1
        %s472 = scalar_select %p471, %s25, 1
        %s473 = smul.addr %s472, 16
        %s474 = smul.addr %s473, 4
        %s475 = scalar_lea.vmem %s10, %s474
        %p476 = scmp.lt.s32.totalorder %s25, 1
        %s477 = scalar_select %p476, %s25, 1
        %s478 = smul.addr %s477, 32
        %s479 = smul.addr %s478, 4
        %s480 = scalar_lea.vmem %s11, %s479
        %p482 = scmp.eq.s32.totalorder %s25, 0
        // Predicated region
        $region73: #{cohere_model_forward.1} parent=71 // pred_check
          %p483 = pneg %p482
        $region74: #{cohere_model_forward.1} parent=71 // pred_check_branch
          %485 = sbr.rel (%p483) target = $region76
        $region75: #{cohere_model_forward.1} parent=71 // pred_region
          %v486 = vld [vmem:[%s0] sm:$0xf]
          %v487 = vld [vmem:[%s0 + $0x4] sm:$0xf]
          %v488 = vunpack.c.l.bf16 %v486
          %v489 = vunpack.c.l.bf16 %v487
          %490 = vst [vmem:[#allocation2] sm:$0xff] %v488
          %491 = vst [vmem:[#allocation2 + $0x8] sm:$0xff] %v489
          %492 = vst [vmem:[#allocation3] sm:$0xff] 0.0
          %493 = vst [vmem:[#allocation3 + $0x8] sm:$0xff] 0.0
        $region76: #{cohere_model_forward.1} parent=71 // pred_fallthru
          _
        %v494 = vld [vmem:[#allocation2] sm:$0xff]
        %v495 = vld [vmem:[#allocation2 + $0x8] sm:$0xff]
        %v496 = vld [vmem:[#allocation3] sm:$0xff]
        %v497 = vld [vmem:[#allocation3 + $0x8] sm:$0xff]
        %v498 = vadd.f32 %v494, %v496
        %v499 = vadd.f32 %v495, %v497
        %500 = vst [vmem:[#allocation3] sm:$0xff] %v498
        %501 = vst [vmem:[#allocation3 + $0x8] sm:$0xff] %v499
        %v502 = vld [vmem:[%s465] sm:$0x1]
        %503 = vadd.xlane.f32.xlu0 %v498
        %v504 = vpop.xlane.xlu0 %503
        %505 = vadd.xlane.f32.xlu0 %v499
        %v506 = vpop.xlane.xlu0 %505
        %v507 = vrcp.pop 128.0
        %v508 = vmul.f32 %v504, %v507
        %v509 = vmul.f32 %v506, %v507
        %v510 = vsub.f32 %v498, %v508
        %v511 = vsub.f32 %v499, %v509
        %v512 = vmul.f32 %v510, %v510
        %v513 = vmul.f32 %v511, %v511
        %514 = vadd.xlane.f32.xlu0 %v512
        %v515 = vpop.xlane.xlu0 %514
        %516 = vadd.xlane.f32.xlu0 %v513
        %v517 = vpop.xlane.xlu0 %516
        %v518 = vmul.f32 %v515, %v507
        %v519 = vmul.f32 %v517, %v507
        %v520 = vadd.f32 %v518, 1e-05
        %v521 = vadd.f32 %v519, 1e-05
        %v522 = vrsqrt.pop %v520
        %v523 = vrsqrt.pop %v521
        %v524 = vmul.f32 %v510, %v522
        %v525 = vmul.f32 %v511, %v523
        %v527 = vlaneseq
        %v528 = vshrl.u32 %v527, 7
        %v529 = vsub.s32 0, %v528
        %v530 = vrot.slane %v502, %v529
        %v532 = vmul.f32 %v524, %v530
        %v533 = vmul.f32 %v525, %v530
        %v534 = vpack.c.bf16 %v533, %v532
        %v535 = vld [vmem:[%s470] sm:$0xff]
        %v536 = vld [vmem:[%s470 + $0x8] sm:$0xff]
        %v537 = vld [vmem:[%s470 + $0x10] sm:$0xff]
        %v538 = vld [vmem:[%s470 + $0x18] sm:$0xff]
        %v539 = vld [vmem:[%s470 + $0x20] sm:$0xff]
        %v540 = vld [vmem:[%s470 + $0x28] sm:$0xff]
        %v541 = vld [vmem:[%s470 + $0x30] sm:$0xff]
        %v542 = vld [vmem:[%s470 + $0x38] sm:$0xff]
        %v543 = vld [vmem:[%s470 + $0x40] sm:$0xff]
        %v544 = vld [vmem:[%s470 + $0x48] sm:$0xff]
        %v545 = vld [vmem:[%s470 + $0x50] sm:$0xff]
        %v546 = vld [vmem:[%s470 + $0x58] sm:$0xff]
        %v547 = vld [vmem:[%s470 + $0x60] sm:$0xff]
        %v548 = vld [vmem:[%s470 + $0x68] sm:$0xff]
        %v549 = vld [vmem:[%s470 + $0x70] sm:$0xff]
        %v550 = vld [vmem:[%s470 + $0x78] sm:$0xff]
        %v551 = vld [vmem:[%s470 + $0x80] sm:$0xff]
        %v552 = vld [vmem:[%s470 + $0x88] sm:$0xff]
        %v553 = vld [vmem:[%s470 + $0x90] sm:$0xff]
        %v554 = vld [vmem:[%s470 + $0x98] sm:$0xff]
        %v555 = vld [vmem:[%s470 + $0xa0] sm:$0xff]
        %v556 = vld [vmem:[%s470 + $0xa8] sm:$0xff]
        %v557 = vld [vmem:[%s470 + $0xb0] sm:$0xff]
        %v558 = vld [vmem:[%s470 + $0xb8] sm:$0xff]
        %v559 = vld [vmem:[%s470 + $0xc0] sm:$0xff]
        %v560 = vld [vmem:[%s470 + $0xc8] sm:$0xff]
        %v561 = vld [vmem:[%s470 + $0xd0] sm:$0xff]
        %v562 = vld [vmem:[%s470 + $0xd8] sm:$0xff]
        %v563 = vld [vmem:[%s470 + $0xe0] sm:$0xff]
        %v564 = vld [vmem:[%s470 + $0xe8] sm:$0xff]
        %v565 = vld [vmem:[%s470 + $0xf0] sm:$0xff]
        %v566 = vld [vmem:[%s470 + $0xf8] sm:$0xff]
        %v567 = vld [vmem:[%s470 + $0x100] sm:$0xff]
        %v568 = vld [vmem:[%s470 + $0x108] sm:$0xff]
        %v569 = vld [vmem:[%s470 + $0x110] sm:$0xff]
        %v570 = vld [vmem:[%s470 + $0x118] sm:$0xff]
        %v571 = vld [vmem:[%s470 + $0x120] sm:$0xff]
        %v572 = vld [vmem:[%s470 + $0x128] sm:$0xff]
        %v573 = vld [vmem:[%s470 + $0x130] sm:$0xff]
        %v574 = vld [vmem:[%s470 + $0x138] sm:$0xff]
        %v575 = vld [vmem:[%s470 + $0x140] sm:$0xff]
        %v576 = vld [vmem:[%s470 + $0x148] sm:$0xff]
        %v577 = vld [vmem:[%s470 + $0x150] sm:$0xff]
        %v578 = vld [vmem:[%s470 + $0x158] sm:$0xff]
        %v579 = vld [vmem:[%s470 + $0x160] sm:$0xff]
        %v580 = vld [vmem:[%s470 + $0x168] sm:$0xff]
        %v581 = vld [vmem:[%s470 + $0x170] sm:$0xff]
        %v582 = vld [vmem:[%s470 + $0x178] sm:$0xff]
        %v631 = vunpack.c.l.b16 %v535
        %v632 = vunpack.c.h.b16 %v535
        %v633 = vunpack.c.l.b16 %v536
        %v634 = vunpack.c.h.b16 %v536
        %v635 = vunpack.c.l.b16 %v537
        %v636 = vunpack.c.h.b16 %v537
        %v637 = vunpack.c.l.b16 %v538
        %v638 = vunpack.c.h.b16 %v538
        %v639 = vunpack.c.l.b16 %v539
        %v640 = vunpack.c.h.b16 %v539
        %v641 = vunpack.c.l.b16 %v540
        %v642 = vunpack.c.h.b16 %v540
        %v643 = vunpack.c.l.b16 %v541
        %v644 = vunpack.c.h.b16 %v541
        %v645 = vunpack.c.l.b16 %v542
        %v646 = vunpack.c.h.b16 %v542
        %v647 = vunpack.c.l.b16 %v543
        %v648 = vunpack.c.h.b16 %v543
        %v649 = vunpack.c.l.b16 %v544
        %v650 = vunpack.c.h.b16 %v544
        %v651 = vunpack.c.l.b16 %v545
        %v652 = vunpack.c.h.b16 %v545
        %v653 = vunpack.c.l.b16 %v546
        %v654 = vunpack.c.h.b16 %v546
        %v655 = vunpack.c.l.b16 %v547
        %v656 = vunpack.c.h.b16 %v547
        %v657 = vunpack.c.l.b16 %v548
        %v658 = vunpack.c.h.b16 %v548
        %v659 = vunpack.c.l.b16 %v549
        %v660 = vunpack.c.h.b16 %v549
        %v661 = vunpack.c.l.b16 %v550
        %v662 = vunpack.c.h.b16 %v550
        %v663 = vunpack.c.l.b16 %v551
        %v664 = vunpack.c.h.b16 %v551
        %v665 = vunpack.c.l.b16 %v552
        %v666 = vunpack.c.h.b16 %v552
        %v667 = vunpack.c.l.b16 %v553
        %v668 = vunpack.c.h.b16 %v553
        %v669 = vunpack.c.l.b16 %v554
        %v670 = vunpack.c.h.b16 %v554
        %v671 = vunpack.c.l.b16 %v555
        %v672 = vunpack.c.h.b16 %v555
        %v673 = vunpack.c.l.b16 %v556
        %v674 = vunpack.c.h.b16 %v556
        %v675 = vunpack.c.l.b16 %v557
        %v676 = vunpack.c.h.b16 %v557
        %v677 = vunpack.c.l.b16 %v558
        %v678 = vunpack.c.h.b16 %v558
        %v679 = vunpack.c.l.b16 %v559
        %v680 = vunpack.c.h.b16 %v559
        %v681 = vunpack.c.l.b16 %v560
        %v682 = vunpack.c.h.b16 %v560
        %v683 = vunpack.c.l.b16 %v561
        %v684 = vunpack.c.h.b16 %v561
        %v685 = vunpack.c.l.b16 %v562
        %v686 = vunpack.c.h.b16 %v562
        %v687 = vunpack.c.l.b16 %v563
        %v688 = vunpack.c.h.b16 %v563
        %v689 = vunpack.c.l.b16 %v564
        %v690 = vunpack.c.h.b16 %v564
        %v691 = vunpack.c.l.b16 %v565
        %v692 = vunpack.c.h.b16 %v565
        %v693 = vunpack.c.l.b16 %v566
        %v694 = vunpack.c.h.b16 %v566
        %v695 = vunpack.c.l.b16 %v567
        %v696 = vunpack.c.h.b16 %v567
        %v697 = vunpack.c.l.b16 %v568
        %v698 = vunpack.c.h.b16 %v568
        %v699 = vunpack.c.l.b16 %v569
        %v700 = vunpack.c.h.b16 %v569
        %v701 = vunpack.c.l.b16 %v570
        %v702 = vunpack.c.h.b16 %v570
        %v703 = vunpack.c.l.b16 %v571
        %v704 = vunpack.c.h.b16 %v571
        %v705 = vunpack.c.l.b16 %v572
        %v706 = vunpack.c.h.b16 %v572
        %v707 = vunpack.c.l.b16 %v573
        %v708 = vunpack.c.h.b16 %v573
        %v709 = vunpack.c.l.b16 %v574
        %v710 = vunpack.c.h.b16 %v574
        %v711 = vunpack.c.l.b16 %v575
        %v712 = vunpack.c.h.b16 %v575
        %v713 = vunpack.c.l.b16 %v576
        %v714 = vunpack.c.h.b16 %v576
        %v715 = vunpack.c.l.b16 %v577
        %v716 = vunpack.c.h.b16 %v577
        %v717 = vunpack.c.l.b16 %v578
        %v718 = vunpack.c.h.b16 %v578
        %v719 = vunpack.c.l.b16 %v579
        %v720 = vunpack.c.h.b16 %v579
        %v721 = vunpack.c.l.b16 %v580
        %v722 = vunpack.c.h.b16 %v580
        %v723 = vunpack.c.l.b16 %v581
        %v724 = vunpack.c.h.b16 %v581
        %v725 = vunpack.c.l.b16 %v582
        %v726 = vunpack.c.h.b16 %v582
        %v727 = vpack.c.b16 %v637, %v631
        %v728 = vpack.c.b16 %v638, %v632
        %v729 = vpack.c.b16 %v639, %v633
        %v730 = vpack.c.b16 %v640, %v634
        %v731 = vpack.c.b16 %v641, %v635
        %v732 = vpack.c.b16 %v642, %v636
        %v733 = vpack.c.b16 %v649, %v643
        %v734 = vpack.c.b16 %v650, %v644
        %v735 = vpack.c.b16 %v651, %v645
        %v736 = vpack.c.b16 %v652, %v646
        %v737 = vpack.c.b16 %v653, %v647
        %v738 = vpack.c.b16 %v654, %v648
        %v739 = vpack.c.b16 %v661, %v655
        %v740 = vpack.c.b16 %v662, %v656
        %v741 = vpack.c.b16 %v663, %v657
        %v742 = vpack.c.b16 %v664, %v658
        %v743 = vpack.c.b16 %v665, %v659
        %v744 = vpack.c.b16 %v666, %v660
        %v745 = vpack.c.b16 %v673, %v667
        %v746 = vpack.c.b16 %v674, %v668
        %v747 = vpack.c.b16 %v675, %v669
        %v748 = vpack.c.b16 %v676, %v670
        %v749 = vpack.c.b16 %v677, %v671
        %v750 = vpack.c.b16 %v678, %v672
        %v751 = vpack.c.b16 %v685, %v679
        %v752 = vpack.c.b16 %v686, %v680
        %v753 = vpack.c.b16 %v687, %v681
        %v754 = vpack.c.b16 %v688, %v682
        %v755 = vpack.c.b16 %v689, %v683
        %v756 = vpack.c.b16 %v690, %v684
        %v757 = vpack.c.b16 %v697, %v691
        %v758 = vpack.c.b16 %v698, %v692
        %v759 = vpack.c.b16 %v699, %v693
        %v760 = vpack.c.b16 %v700, %v694
        %v761 = vpack.c.b16 %v701, %v695
        %v762 = vpack.c.b16 %v702, %v696
        %v763 = vpack.c.b16 %v709, %v703
        %v764 = vpack.c.b16 %v710, %v704
        %v765 = vpack.c.b16 %v711, %v705
        %v766 = vpack.c.b16 %v712, %v706
        %v767 = vpack.c.b16 %v713, %v707
        %v768 = vpack.c.b16 %v714, %v708
        %v769 = vpack.c.b16 %v721, %v715
        %v770 = vpack.c.b16 %v722, %v716
        %v771 = vpack.c.b16 %v723, %v717
        %v772 = vpack.c.b16 %v724, %v718
        %v773 = vpack.c.b16 %v725, %v719
        %v774 = vpack.c.b16 %v726, %v720
        %823 = vmatprep.subr.bf16.mxu0 %v770
        %824 = vmatpush1.bf16.msra.mxu0 %v769
        %825 = vmatprep.subr.bf16.mxu0 %v764
        %826 = vmatpush1.bf16.msra.mxu0 %v763
        %827 = vmatprep.subr.bf16.mxu0 %v758
        %828 = vmatpush1.bf16.msra.mxu0 %v757
        %829 = vmatprep.subr.bf16.mxu0 %v752
        %830 = vmatpush1.bf16.msra.mxu0 %v751
        %831 = vmatprep.subr.bf16.mxu0 %v746
        %832 = vmatpush1.bf16.msra.mxu0 %v745
        %833 = vmatprep.subr.bf16.mxu0 %v740
        %834 = vmatpush1.bf16.msra.mxu0 %v739
        %835 = vmatprep.subr.bf16.mxu0 %v734
        %836 = vmatpush1.bf16.msra.mxu0 %v733
        %837 = vmatprep.subr.bf16.mxu0 %v728
        %838 = vmatpush1.bf16.msra.mxu0 %v727
        %839 = vmatprep.subr.bf16.mxu0 0
        %840 = vmatpush2.bf16.msra.mxu0 0
        %841 = vmatprep.subr.bf16.mxu0 0
        %842 = vmatpush2.bf16.msra.mxu0 0
        %843 = vmatprep.subr.bf16.mxu0 0
        %844 = vmatpush2.bf16.msra.mxu0 0
        %845 = vmatprep.subr.bf16.mxu0 0
        %846 = vmatpush2.bf16.msra.mxu0 0
        %847 = vmatprep.subr.bf16.mxu0 0
        %848 = vmatpush2.bf16.msra.mxu0 0
        %849 = vmatprep.subr.bf16.mxu0 0
        %850 = vmatpush2.bf16.msra.mxu0 0
        %851 = vmatprep.subr.bf16.mxu0 0
        %852 = vmatpush2.bf16.msra.mxu0 0
        %853 = vmatprep.subr.bf16.mxu0 0
        %854 = vmatpush2.bf16.msra.mxu0 0
        %855 = vmatprep.mubr.bf16.mxu0 0
        %856 = vmatmul.mubr.bf16.gmra.mxu0 %v534
        %v857 = vpop.f32.mrf.mxu0
        %v858 = vadd.f32 0.0, %v857
        %v859 = vpop.f32.mrf.mxu0
        %v860 = vadd.f32 0.0, %v859
        %v861 = vpop.f32.mrf.mxu0
        %v862 = vadd.f32 0.0, %v861
        %v863 = vpop.f32.mrf.mxu0
        %v864 = vadd.f32 0.0, %v863
        %865 = vdwg.mxu0
        %866 = vmatprep.subr.bf16.mxu0 %v772
        %867 = vmatpush1.bf16.msra.mxu0 %v771
        %868 = vmatprep.subr.bf16.mxu0 %v766
        %869 = vmatpush1.bf16.msra.mxu0 %v765
        %870 = vmatprep.subr.bf16.mxu0 %v760
        %871 = vmatpush1.bf16.msra.mxu0 %v759
        %872 = vmatprep.subr.bf16.mxu0 %v754
        %873 = vmatpush1.bf16.msra.mxu0 %v753
        %874 = vmatprep.subr.bf16.mxu0 %v748
        %875 = vmatpush1.bf16.msra.mxu0 %v747
        %876 = vmatprep.subr.bf16.mxu0 %v742
        %877 = vmatpush1.bf16.msra.mxu0 %v741
        %878 = vmatprep.subr.bf16.mxu0 %v736
        %879 = vmatpush1.bf16.msra.mxu0 %v735
        %880 = vmatprep.subr.bf16.mxu0 %v730
        %881 = vmatpush1.bf16.msra.mxu0 %v729
        %882 = vmatprep.subr.bf16.mxu0 0
        %883 = vmatpush2.bf16.msra.mxu0 0
        %884 = vmatprep.subr.bf16.mxu0 0
        %885 = vmatpush2.bf16.msra.mxu0 0
        %886 = vmatprep.subr.bf16.mxu0 0
        %887 = vmatpush2.bf16.msra.mxu0 0
        %888 = vmatprep.subr.bf16.mxu0 0
        %889 = vmatpush2.bf16.msra.mxu0 0
        %890 = vmatprep.subr.bf16.mxu0 0
        %891 = vmatpush2.bf16.msra.mxu0 0
        %892 = vmatprep.subr.bf16.mxu0 0
        %893 = vmatpush2.bf16.msra.mxu0 0
        %894 = vmatprep.subr.bf16.mxu0 0
        %895 = vmatpush2.bf16.msra.mxu0 0
        %896 = vmatprep.subr.bf16.mxu0 0
        %897 = vmatpush2.bf16.msra.mxu0 0
        %898 = vmatprep.mubr.bf16.mxu0 0
        %899 = vmatmul.mubr.bf16.gmra.mxu0 %v534
        %v900 = vpop.f32.mrf.mxu0
        %v901 = vadd.f32 0.0, %v900
        %v902 = vpop.f32.mrf.mxu0
        %v903 = vadd.f32 0.0, %v902
        %v904 = vpop.f32.mrf.mxu0
        %v905 = vadd.f32 0.0, %v904
        %v906 = vpop.f32.mrf.mxu0
        %v907 = vadd.f32 0.0, %v906
        %908 = vdwg.mxu0
        %909 = vmatprep.subr.bf16.mxu0 %v774
        %910 = vmatpush1.bf16.msra.mxu0 %v773
        %911 = vmatprep.subr.bf16.mxu0 %v768
        %912 = vmatpush1.bf16.msra.mxu0 %v767
        %913 = vmatprep.subr.bf16.mxu0 %v762
        %914 = vmatpush1.bf16.msra.mxu0 %v761
        %915 = vmatprep.subr.bf16.mxu0 %v756
        %916 = vmatpush1.bf16.msra.mxu0 %v755
        %917 = vmatprep.subr.bf16.mxu0 %v750
        %918 = vmatpush1.bf16.msra.mxu0 %v749
        %919 = vmatprep.subr.bf16.mxu0 %v744
        %920 = vmatpush1.bf16.msra.mxu0 %v743
        %921 = vmatprep.subr.bf16.mxu0 %v738
        %922 = vmatpush1.bf16.msra.mxu0 %v737
        %923 = vmatprep.subr.bf16.mxu0 %v732
        %924 = vmatpush1.bf16.msra.mxu0 %v731
        %925 = vmatprep.subr.bf16.mxu0 0
        %926 = vmatpush2.bf16.msra.mxu0 0
        %927 = vmatprep.subr.bf16.mxu0 0
        %928 = vmatpush2.bf16.msra.mxu0 0
        %929 = vmatprep.subr.bf16.mxu0 0
        %930 = vmatpush2.bf16.msra.mxu0 0
        %931 = vmatprep.subr.bf16.mxu0 0
        %932 = vmatpush2.bf16.msra.mxu0 0
        %933 = vmatprep.subr.bf16.mxu0 0
        %934 = vmatpush2.bf16.msra.mxu0 0
        %935 = vmatprep.subr.bf16.mxu0 0
        %936 = vmatpush2.bf16.msra.mxu0 0
        %937 = vmatprep.subr.bf16.mxu0 0
        %938 = vmatpush2.bf16.msra.mxu0 0
        %939 = vmatprep.subr.bf16.mxu0 0
        %940 = vmatpush2.bf16.msra.mxu0 0
        %941 = vmatprep.mubr.bf16.mxu0 0
        %942 = vmatmul.mubr.bf16.gmra.mxu0 %v534
        %v943 = vpop.f32.mrf.mxu0
        %v944 = vadd.f32 0.0, %v943
        %v945 = vpop.f32.mrf.mxu0
        %v946 = vadd.f32 0.0, %v945
        %v947 = vpop.f32.mrf.mxu0
        %v948 = vadd.f32 0.0, %v947
        %v949 = vpop.f32.mrf.mxu0
        %v950 = vadd.f32 0.0, %v949
        %951 = vdwg.mxu0
        %v952 = vld [vmem:[%s1] sm:$0xff]
        %v953 = vld [vmem:[%s1 + $0x8] sm:$0xff]
        %v954 = vld [vmem:[%s2] sm:$0xff]
        %v955 = vld [vmem:[%s2 + $0x8] sm:$0xff]
        %v956 = vld [vmem:[%s3] sm:$0xff]
        %v957 = vld [vmem:[%s3 + $0x8] sm:$0xff]
        %958 = vrot.lane.b32.xlu0 %v858, 127
        %v959 = vpop.permute.xlu0 %958
        %960 = vrot.lane.b32.xlu0 %v862, 127
        %v961 = vpop.permute.xlu0 %960
        %962 = vrot.lane.b32.xlu0 %v858, 1
        %v963 = vpop.permute.xlu0 %962
        %964 = vrot.lane.b32.xlu0 %v862, 1
        %v965 = vpop.permute.xlu0 %964
        %v966 = vmul.f32 %v858, %v952
        %v967 = vmul.f32 %v862, %v953
        %v968 = vmul.f32 %v959, %v954
        %v969 = vmul.f32 %v961, %v955
        %v970 = vadd.f32 %v966, %v968
        %v971 = vadd.f32 %v967, %v969
        %v972 = vmul.f32 %v963, %v956
        %v973 = vmul.f32 %v965, %v957
        %v974 = vadd.f32 %v970, %v972
        %v975 = vadd.f32 %v971, %v973
        %v976 = vld [vmem:[%s4] sm:$0xff]
        %v977 = vld [vmem:[%s4 + $0x8] sm:$0xff]
        %v978 = vld [vmem:[%s5] sm:$0xff]
        %v979 = vld [vmem:[%s5 + $0x8] sm:$0xff]
        %v980 = vld [vmem:[%s6] sm:$0xff]
        %v981 = vld [vmem:[%s6 + $0x8] sm:$0xff]
        %982 = vrot.lane.b32.xlu0 %v860, 127
        %v983 = vpop.permute.xlu0 %982
        %984 = vrot.lane.b32.xlu0 %v864, 127
        %v985 = vpop.permute.xlu0 %984
        %986 = vrot.lane.b32.xlu0 %v860, 1
        %v987 = vpop.permute.xlu0 %986
        %988 = vrot.lane.b32.xlu0 %v864, 1
        %v989 = vpop.permute.xlu0 %988
        %v990 = vmul.f32 %v860, %v976
        %v991 = vmul.f32 %v864, %v977
        %v992 = vmul.f32 %v983, %v978
        %v993 = vmul.f32 %v985, %v979
        %v994 = vadd.f32 %v990, %v992
        %v995 = vadd.f32 %v991, %v993
        %v996 = vmul.f32 %v987, %v980
        %v997 = vmul.f32 %v989, %v981
        %v998 = vadd.f32 %v994, %v996
        %v999 = vadd.f32 %v995, %v997
        %v1000 = vpack.c.bf16 %v975, %v974
        %v1001 = vpack.c.bf16 %v999, %v998
        %v1002 = vld [vmem:[%s7] sm:$0xff]
        %v1003 = vld [vmem:[%s7 + $0x8] sm:$0xff]
        %vm1004 = vcmask 261120
        %v1006 = vsel %vm1004, %v1000, 0
        %v1009 = vsel %vm1004, %v1001, 0
        %1011 = vmatprep.subr.bf16.mxu0 0
        %1012 = vmatpush1.bf16.xpose.msra.mxu0 0
        %1013 = vmatprep.subr.bf16.mxu0 0
        %1014 = vmatpush1.bf16.xpose.msra.mxu0 0
        %1015 = vmatprep.subr.bf16.mxu0 0
        %1016 = vmatpush1.bf16.xpose.msra.mxu0 0
        %1017 = vmatprep.subr.bf16.mxu0 0
        %1018 = vmatpush1.bf16.xpose.msra.mxu0 0
        %1019 = vmatprep.subr.bf16.mxu0 0
        %1020 = vmatpush1.bf16.xpose.msra.mxu0 0
        %1021 = vmatprep.subr.bf16.mxu0 0
        %1022 = vmatpush1.bf16.xpose.msra.mxu0 0
        %1023 = vmatprep.subr.bf16.mxu0 0
        %1024 = vmatpush1.bf16.xpose.msra.mxu0 0
        %1025 = vmatprep.subr.bf16.mxu0 0
        %1026 = vmatpush1.bf16.xpose.msra.mxu0 %v1009
        %1027 = vmatprep.subr.bf16.mxu0 0
        %1028 = vmatpush2.bf16.xpose.msra.mxu0 0
        %1029 = vmatprep.subr.bf16.mxu0 0
        %1030 = vmatpush2.bf16.xpose.msra.mxu0 0
        %1031 = vmatprep.subr.bf16.mxu0 0
        %1032 = vmatpush2.bf16.xpose.msra.mxu0 0
        %1033 = vmatprep.subr.bf16.mxu0 0
        %1034 = vmatpush2.bf16.xpose.msra.mxu0 0
        %1035 = vmatprep.subr.bf16.mxu0 0
        %1036 = vmatpush2.bf16.xpose.msra.mxu0 0
        %1037 = vmatprep.subr.bf16.mxu0 0
        %1038 = vmatpush2.bf16.xpose.msra.mxu0 0
        %1039 = vmatprep.subr.bf16.mxu0 0
        %1040 = vmatpush2.bf16.xpose.msra.mxu0 0
        %1041 = vmatprep.subr.bf16.mxu0 0
        %1042 = vmatpush2.bf16.xpose.msra.mxu0 0
        %1043 = vmatprep.mubr.bf16.mxu0 0
        %1044 = vmatmul.mubr.bf16.gmra.mxu0 %v1006
        %v1045 = vpop.f32.mrf.mxu0
        %v1046 = vadd.f32 %v1002, %v1045
        %v1047 = vpop.f32.mrf.mxu0
        %v1048 = vpop.f32.mrf.mxu0
        %v1049 = vadd.f32 %v1003, %v1048
        %v1050 = vpop.f32.mrf.mxu0
        %1051 = vdwg.mxu0
        %vm1052 = vcmask 130048
        %v1053 = vsel %vm1052, %v1046, -inf
        %1054 = vmax.xlane.f32.xlu0 %v1053
        %v1055 = vpop.xlane.xlu0 %1054
        %v1056 = vsel %vm1052, %v1049, -inf
        %1057 = vmax.xlane.f32.xlu0 %v1056
        %v1058 = vpop.xlane.xlu0 %1057
        %v1059 = vsub.f32 %v1046, %v1055
        %v1060 = vsub.f32 %v1049, %v1058
        %v1061 = vmul.f32 %v1059, 1.442695
        %v1062 = vpow.pop %v1061
        %v1063 = vmul.f32 %v1060, 1.442695
        %v1064 = vpow.pop %v1063
        %v1065 = vsel %vm1052, %v1062, 0.0
        %1066 = vadd.xlane.f32.xlu0 %v1065
        %v1067 = vpop.xlane.xlu0 %1066
        %v1068 = vsel %vm1052, %v1064, 0.0
        %1069 = vadd.xlane.f32.xlu0 %v1068
        %v1070 = vpop.xlane.xlu0 %1069
        %v1071 = vpack.c.bf16 %v1064, %v1062
        %1073 = vrot.lane.b32.xlu0 %v1001, 64
        %v1074 = vpop.permute.xlu0 %1073
        %v1077 = vsel %vm1052, %v1071, 0
        %1079 = vmatprep.subr.bf16.mxu0 0
        %1080 = vmatpush1.bf16.msra.mxu0 0
        %1081 = vmatprep.subr.bf16.mxu0 0
        %1082 = vmatpush1.bf16.msra.mxu0 0
        %1083 = vmatprep.subr.bf16.mxu0 0
        %1084 = vmatpush1.bf16.msra.mxu0 0
        %1085 = vmatprep.subr.bf16.mxu0 0
        %1086 = vmatpush1.bf16.msra.mxu0 0
        %1087 = vmatprep.subr.bf16.mxu0 0
        %1088 = vmatpush1.bf16.msra.mxu0 0
        %1089 = vmatprep.subr.bf16.mxu0 0
        %1090 = vmatpush1.bf16.msra.mxu0 0
        %1091 = vmatprep.subr.bf16.mxu0 0
        %1092 = vmatpush1.bf16.msra.mxu0 0
        %1093 = vmatprep.subr.bf16.mxu0 0
        %1094 = vmatpush1.bf16.msra.mxu0 %v1074
        %1095 = vmatprep.subr.bf16.mxu0 0
        %1096 = vmatpush2.bf16.msra.mxu0 0
        %1097 = vmatprep.subr.bf16.mxu0 0
        %1098 = vmatpush2.bf16.msra.mxu0 0
        %1099 = vmatprep.subr.bf16.mxu0 0
        %1100 = vmatpush2.bf16.msra.mxu0 0
        %1101 = vmatprep.subr.bf16.mxu0 0
        %1102 = vmatpush2.bf16.msra.mxu0 0
        %1103 = vmatprep.subr.bf16.mxu0 0
        %1104 = vmatpush2.bf16.msra.mxu0 0
        %1105 = vmatprep.subr.bf16.mxu0 0
        %1106 = vmatpush2.bf16.msra.mxu0 0
        %1107 = vmatprep.subr.bf16.mxu0 0
        %1108 = vmatpush2.bf16.msra.mxu0 0
        %1109 = vmatprep.subr.bf16.mxu0 0
        %1110 = vmatpush2.bf16.msra.mxu0 0
        %1111 = vmatprep.mubr.bf16.mxu0 0
        %1112 = vmatmul.mubr.bf16.gmra.mxu0 %v1077
        %v1113 = vpop.f32.mrf.mxu0
        %v1114 = vadd.f32 0.0, %v1113
        %v1115 = vpop.f32.mrf.mxu0
        %v1116 = vpop.f32.mrf.mxu0
        %v1117 = vadd.f32 0.0, %v1116
        %v1118 = vpop.f32.mrf.mxu0
        %1119 = vdwg.mxu0
        %v1120 = vrcp.pop %v1067
        %v1121 = vrcp.pop %v1070
        %v1122 = vmul.f32 %v1114, %v1120
        %v1123 = vmul.f32 %v1117, %v1121
        %v1124 = vpack.c.bf16 %v1123, %v1122
        %v1126 = vunpack.c.l.b16 %v1124
        %v1127 = vunpack.c.h.b16 %v1124
        %v1128 = vpack.c.b16 %v1126, %v1126
        %v1129 = vpack.c.b16 %v1127, %v1127
        %vm1132 = vcmask 257024
        %1133 = vst.msk [vmem:[#allocation4] sm:$0xf] %vm1132, %v1128
        %1134 = vst.msk [vmem:[#allocation4 + $0x4] sm:$0xf] %vm1132, %v1129
        %1136 = vrot.lane.b32.xlu0 %v1000, 96
        %v1137 = vpop.permute.xlu0 %1136
        %v1139 = vsel %vm1004, %v1137, 0
        %1141 = vmatprep.subr.bf16.mxu0 0
        %1142 = vmatpush1.bf16.xpose.msra.mxu0 0
        %1143 = vmatprep.subr.bf16.mxu0 0
        %1144 = vmatpush1.bf16.xpose.msra.mxu0 0
        %1145 = vmatprep.subr.bf16.mxu0 0
        %1146 = vmatpush1.bf16.xpose.msra.mxu0 0
        %1147 = vmatprep.subr.bf16.mxu0 0
        %1148 = vmatpush1.bf16.xpose.msra.mxu0 0
        %1149 = vmatprep.subr.bf16.mxu0 0
        %1150 = vmatpush1.bf16.xpose.msra.mxu0 0
        %1151 = vmatprep.subr.bf16.mxu0 0
        %1152 = vmatpush1.bf16.xpose.msra.mxu0 0
        %1153 = vmatprep.subr.bf16.mxu0 0
        %1154 = vmatpush1.bf16.xpose.msra.mxu0 0
        %1155 = vmatprep.subr.bf16.mxu0 0
        %1156 = vmatpush1.bf16.xpose.msra.mxu0 %v1009
        %1157 = vmatprep.subr.bf16.mxu0 0
        %1158 = vmatpush2.bf16.xpose.msra.mxu0 0
        %1159 = vmatprep.subr.bf16.mxu0 0
        %1160 = vmatpush2.bf16.xpose.msra.mxu0 0
        %1161 = vmatprep.subr.bf16.mxu0 0
        %1162 = vmatpush2.bf16.xpose.msra.mxu0 0
        %1163 = vmatprep.subr.bf16.mxu0 0
        %1164 = vmatpush2.bf16.xpose.msra.mxu0 0
        %1165 = vmatprep.subr.bf16.mxu0 0
        %1166 = vmatpush2.bf16.xpose.msra.mxu0 0
        %1167 = vmatprep.subr.bf16.mxu0 0
        %1168 = vmatpush2.bf16.xpose.msra.mxu0 0
        %1169 = vmatprep.subr.bf16.mxu0 0
        %1170 = vmatpush2.bf16.xpose.msra.mxu0 0
        %1171 = vmatprep.subr.bf16.mxu0 0
        %1172 = vmatpush2.bf16.xpose.msra.mxu0 0
        %1173 = vmatprep.mubr.bf16.mxu0 0
        %1174 = vmatmul.mubr.bf16.gmra.mxu0 %v1139
        %v1175 = vpop.f32.mrf.mxu0
        %v1176 = vadd.f32 %v1002, %v1175
        %v1177 = vpop.f32.mrf.mxu0
        %v1178 = vpop.f32.mrf.mxu0
        %v1179 = vadd.f32 %v1003, %v1178
        %v1180 = vpop.f32.mrf.mxu0
        %1181 = vdwg.mxu0
        %v1182 = vsel %vm1052, %v1176, -inf
        %1183 = vmax.xlane.f32.xlu0 %v1182
        %v1184 = vpop.xlane.xlu0 %1183
        %v1185 = vsel %vm1052, %v1179, -inf
        %1186 = vmax.xlane.f32.xlu0 %v1185
        %v1187 = vpop.xlane.xlu0 %1186
        %v1188 = vsub.f32 %v1176, %v1184
        %v1189 = vsub.f32 %v1179, %v1187
        %v1190 = vmul.f32 %v1188, 1.442695
        %v1191 = vpow.pop %v1190
        %v1192 = vmul.f32 %v1189, 1.442695
        %v1193 = vpow.pop %v1192
        %v1194 = vsel %vm1052, %v1191, 0.0
        %1195 = vadd.xlane.f32.xlu0 %v1194
        %v1196 = vpop.xlane.xlu0 %1195
        %v1197 = vsel %vm1052, %v1193, 0.0
        %1198 = vadd.xlane.f32.xlu0 %v1197
        %v1199 = vpop.xlane.xlu0 %1198
        %v1200 = vpack.c.bf16 %v1193, %v1191
        %v1202 = vsel %vm1052, %v1200, 0
        %1204 = vmatprep.subr.bf16.mxu0 0
        %1205 = vmatpush1.bf16.msra.mxu0 0
        %1206 = vmatprep.subr.bf16.mxu0 0
        %1207 = vmatpush1.bf16.msra.mxu0 0
        %1208 = vmatprep.subr.bf16.mxu0 0
        %1209 = vmatpush1.bf16.msra.mxu0 0
        %1210 = vmatprep.subr.bf16.mxu0 0
        %1211 = vmatpush1.bf16.msra.mxu0 0
        %1212 = vmatprep.subr.bf16.mxu0 0
        %1213 = vmatpush1.bf16.msra.mxu0 0
        %1214 = vmatprep.subr.bf16.mxu0 0
        %1215 = vmatpush1.bf16.msra.mxu0 0
        %1216 = vmatprep.subr.bf16.mxu0 0
        %1217 = vmatpush1.bf16.msra.mxu0 0
        %1218 = vmatprep.subr.bf16.mxu0 0
        %1219 = vmatpush1.bf16.msra.mxu0 %v1074
        %1220 = vmatprep.subr.bf16.mxu0 0
        %1221 = vmatpush2.bf16.msra.mxu0 0
        %1222 = vmatprep.subr.bf16.mxu0 0
        %1223 = vmatpush2.bf16.msra.mxu0 0
        %1224 = vmatprep.subr.bf16.mxu0 0
        %1225 = vmatpush2.bf16.msra.mxu0 0
        %1226 = vmatprep.subr.bf16.mxu0 0
        %1227 = vmatpush2.bf16.msra.mxu0 0
        %1228 = vmatprep.subr.bf16.mxu0 0
        %1229 = vmatpush2.bf16.msra.mxu0 0
        %1230 = vmatprep.subr.bf16.mxu0 0
        %1231 = vmatpush2.bf16.msra.mxu0 0
        %1232 = vmatprep.subr.bf16.mxu0 0
        %1233 = vmatpush2.bf16.msra.mxu0 0
        %1234 = vmatprep.subr.bf16.mxu0 0
        %1235 = vmatpush2.bf16.msra.mxu0 0
        %1236 = vmatprep.mubr.bf16.mxu0 0
        %1237 = vmatmul.mubr.bf16.gmra.mxu0 %v1202
        %v1238 = vpop.f32.mrf.mxu0
        %v1239 = vadd.f32 0.0, %v1238
        %v1240 = vpop.f32.mrf.mxu0
        %v1241 = vpop.f32.mrf.mxu0
        %v1242 = vadd.f32 0.0, %v1241
        %v1243 = vpop.f32.mrf.mxu0
        %1244 = vdwg.mxu0
        %v1245 = vrcp.pop %v1196
        %v1246 = vrcp.pop %v1199
        %v1247 = vmul.f32 %v1239, %v1245
        %v1248 = vmul.f32 %v1242, %v1246
        %v1249 = vpack.c.bf16 %v1248, %v1247
        %v1251 = vunpack.c.l.b16 %v1249
        %v1252 = vunpack.c.h.b16 %v1249
        %v1253 = vpack.c.b16 %v1251, %v1251
        %v1254 = vpack.c.b16 %v1252, %v1252
        %1255 = vrot.lane.b32.xlu0 %v1253, 32
        %v1256 = vpop.permute.xlu0 %1255
        %1257 = vrot.lane.b32.xlu0 %v1254, 32
        %v1258 = vpop.permute.xlu0 %1257
        %vm1261 = vcmask 519424
        %1262 = vst.msk [vmem:[#allocation4] sm:$0xf] %vm1261, %v1256
        %1263 = vst.msk [vmem:[#allocation4 + $0x4] sm:$0xf] %vm1261, %v1258
        %1264 = vrot.lane.b32.xlu0 %v1000, 64
        %v1265 = vpop.permute.xlu0 %1264
        %1266 = vrot.lane.b32.xlu0 %v1001, 96
        %v1267 = vpop.permute.xlu0 %1266
        %v1269 = vsel %vm1004, %v1265, 0
        %v1272 = vsel %vm1004, %v1267, 0
        %1274 = vmatprep.subr.bf16.mxu0 0
        %1275 = vmatpush1.bf16.xpose.msra.mxu0 0
        %1276 = vmatprep.subr.bf16.mxu0 0
        %1277 = vmatpush1.bf16.xpose.msra.mxu0 0
        %1278 = vmatprep.subr.bf16.mxu0 0
        %1279 = vmatpush1.bf16.xpose.msra.mxu0 0
        %1280 = vmatprep.subr.bf16.mxu0 0
        %1281 = vmatpush1.bf16.xpose.msra.mxu0 0
        %1282 = vmatprep.subr.bf16.mxu0 0
        %1283 = vmatpush1.bf16.xpose.msra.mxu0 0
        %1284 = vmatprep.subr.bf16.mxu0 0
        %1285 = vmatpush1.bf16.xpose.msra.mxu0 0
        %1286 = vmatprep.subr.bf16.mxu0 0
        %1287 = vmatpush1.bf16.xpose.msra.mxu0 0
        %1288 = vmatprep.subr.bf16.mxu0 0
        %1289 = vmatpush1.bf16.xpose.msra.mxu0 %v1272
        %1290 = vmatprep.subr.bf16.mxu0 0
        %1291 = vmatpush2.bf16.xpose.msra.mxu0 0
        %1292 = vmatprep.subr.bf16.mxu0 0
        %1293 = vmatpush2.bf16.xpose.msra.mxu0 0
        %1294 = vmatprep.subr.bf16.mxu0 0
        %1295 = vmatpush2.bf16.xpose.msra.mxu0 0
        %1296 = vmatprep.subr.bf16.mxu0 0
        %1297 = vmatpush2.bf16.xpose.msra.mxu0 0
        %1298 = vmatprep.subr.bf16.mxu0 0
        %1299 = vmatpush2.bf16.xpose.msra.mxu0 0
        %1300 = vmatprep.subr.bf16.mxu0 0
        %1301 = vmatpush2.bf16.xpose.msra.mxu0 0
        %1302 = vmatprep.subr.bf16.mxu0 0
        %1303 = vmatpush2.bf16.xpose.msra.mxu0 0
        %1304 = vmatprep.subr.bf16.mxu0 0
        %1305 = vmatpush2.bf16.xpose.msra.mxu0 0
        %1306 = vmatprep.mubr.bf16.mxu0 0
        %1307 = vmatmul.mubr.bf16.gmra.mxu0 %v1269
        %v1308 = vpop.f32.mrf.mxu0
        %v1309 = vadd.f32 %v1002, %v1308
        %v1310 = vpop.f32.mrf.mxu0
        %v1311 = vpop.f32.mrf.mxu0
        %v1312 = vadd.f32 %v1003, %v1311
        %v1313 = vpop.f32.mrf.mxu0
        %1314 = vdwg.mxu0
        %v1315 = vsel %vm1052, %v1309, -inf
        %1316 = vmax.xlane.f32.xlu0 %v1315
        %v1317 = vpop.xlane.xlu0 %1316
        %v1318 = vsel %vm1052, %v1312, -inf
        %1319 = vmax.xlane.f32.xlu0 %v1318
        %v1320 = vpop.xlane.xlu0 %1319
        %v1321 = vsub.f32 %v1309, %v1317
        %v1322 = vsub.f32 %v1312, %v1320
        %v1323 = vmul.f32 %v1321, 1.442695
        %v1324 = vpow.pop %v1323
        %v1325 = vmul.f32 %v1322, 1.442695
        %v1326 = vpow.pop %v1325
        %v1327 = vsel %vm1052, %v1324, 0.0
        %1328 = vadd.xlane.f32.xlu0 %v1327
        %v1329 = vpop.xlane.xlu0 %1328
        %v1330 = vsel %vm1052, %v1326, 0.0
        %1331 = vadd.xlane.f32.xlu0 %v1330
        %v1332 = vpop.xlane.xlu0 %1331
        %v1333 = vpack.c.bf16 %v1326, %v1324
        %1334 = vrot.lane.b32.xlu0 %v1001, 32
        %v1335 = vpop.permute.xlu0 %1334
        %v1338 = vsel %vm1052, %v1333, 0
        %1340 = vmatprep.subr.bf16.mxu0 0
        %1341 = vmatpush1.bf16.msra.mxu0 0
        %1342 = vmatprep.subr.bf16.mxu0 0
        %1343 = vmatpush1.bf16.msra.mxu0 0
        %1344 = vmatprep.subr.bf16.mxu0 0
        %1345 = vmatpush1.bf16.msra.mxu0 0
        %1346 = vmatprep.subr.bf16.mxu0 0
        %1347 = vmatpush1.bf16.msra.mxu0 0
        %1348 = vmatprep.subr.bf16.mxu0 0
        %1349 = vmatpush1.bf16.msra.mxu0 0
        %1350 = vmatprep.subr.bf16.mxu0 0
        %1351 = vmatpush1.bf16.msra.mxu0 0
        %1352 = vmatprep.subr.bf16.mxu0 0
        %1353 = vmatpush1.bf16.msra.mxu0 0
        %1354 = vmatprep.subr.bf16.mxu0 0
        %1355 = vmatpush1.bf16.msra.mxu0 %v1335
        %1356 = vmatprep.subr.bf16.mxu0 0
        %1357 = vmatpush2.bf16.msra.mxu0 0
        %1358 = vmatprep.subr.bf16.mxu0 0
        %1359 = vmatpush2.bf16.msra.mxu0 0
        %1360 = vmatprep.subr.bf16.mxu0 0
        %1361 = vmatpush2.bf16.msra.mxu0 0
        %1362 = vmatprep.subr.bf16.mxu0 0
        %1363 = vmatpush2.bf16.msra.mxu0 0
        %1364 = vmatprep.subr.bf16.mxu0 0
        %1365 = vmatpush2.bf16.msra.mxu0 0
        %1366 = vmatprep.subr.bf16.mxu0 0
        %1367 = vmatpush2.bf16.msra.mxu0 0
        %1368 = vmatprep.subr.bf16.mxu0 0
        %1369 = vmatpush2.bf16.msra.mxu0 0
        %1370 = vmatprep.subr.bf16.mxu0 0
        %1371 = vmatpush2.bf16.msra.mxu0 0
        %1372 = vmatprep.mubr.bf16.mxu0 0
        %1373 = vmatmul.mubr.bf16.gmra.mxu0 %v1338
        %v1374 = vpop.f32.mrf.mxu0
        %v1375 = vadd.f32 0.0, %v1374
        %v1376 = vpop.f32.mrf.mxu0
        %v1377 = vpop.f32.mrf.mxu0
        %v1378 = vadd.f32 0.0, %v1377
        %v1379 = vpop.f32.mrf.mxu0
        %1380 = vdwg.mxu0
        %v1381 = vrcp.pop %v1329
        %v1382 = vrcp.pop %v1332
        %v1383 = vmul.f32 %v1375, %v1381
        %v1384 = vmul.f32 %v1378, %v1382
        %v1385 = vpack.c.bf16 %v1384, %v1383
        %v1387 = vunpack.c.l.b16 %v1385
        %v1388 = vunpack.c.h.b16 %v1385
        %v1389 = vpack.c.b16 %v1387, %v1387
        %v1390 = vpack.c.b16 %v1388, %v1388
        %1391 = vrot.lane.b32.xlu0 %v1389, 64
        %v1392 = vpop.permute.xlu0 %1391
        %1393 = vrot.lane.b32.xlu0 %v1390, 64
        %v1394 = vpop.permute.xlu0 %1393
        %vm1397 = vcmask 781824
        %1398 = vst.msk [vmem:[#allocation4] sm:$0xf] %vm1397, %v1392
        %1399 = vst.msk [vmem:[#allocation4 + $0x4] sm:$0xf] %vm1397, %v1394
        %1400 = vrot.lane.b32.xlu0 %v1000, 32
        %v1401 = vpop.permute.xlu0 %1400
        %v1403 = vsel %vm1004, %v1401, 0
        %1405 = vmatprep.subr.bf16.mxu0 0
        %1406 = vmatpush1.bf16.xpose.msra.mxu0 0
        %1407 = vmatprep.subr.bf16.mxu0 0
        %1408 = vmatpush1.bf16.xpose.msra.mxu0 0
        %1409 = vmatprep.subr.bf16.mxu0 0
        %1410 = vmatpush1.bf16.xpose.msra.mxu0 0
        %1411 = vmatprep.subr.bf16.mxu0 0
        %1412 = vmatpush1.bf16.xpose.msra.mxu0 0
        %1413 = vmatprep.subr.bf16.mxu0 0
        %1414 = vmatpush1.bf16.xpose.msra.mxu0 0
        %1415 = vmatprep.subr.bf16.mxu0 0
        %1416 = vmatpush1.bf16.xpose.msra.mxu0 0
        %1417 = vmatprep.subr.bf16.mxu0 0
        %1418 = vmatpush1.bf16.xpose.msra.mxu0 0
        %1419 = vmatprep.subr.bf16.mxu0 0
        %1420 = vmatpush1.bf16.xpose.msra.mxu0 %v1272
        %1421 = vmatprep.subr.bf16.mxu0 0
        %1422 = vmatpush2.bf16.xpose.msra.mxu0 0
        %1423 = vmatprep.subr.bf16.mxu0 0
        %1424 = vmatpush2.bf16.xpose.msra.mxu0 0
        %1425 = vmatprep.subr.bf16.mxu0 0
        %1426 = vmatpush2.bf16.xpose.msra.mxu0 0
        %1427 = vmatprep.subr.bf16.mxu0 0
        %1428 = vmatpush2.bf16.xpose.msra.mxu0 0
        %1429 = vmatprep.subr.bf16.mxu0 0
        %1430 = vmatpush2.bf16.xpose.msra.mxu0 0
        %1431 = vmatprep.subr.bf16.mxu0 0
        %1432 = vmatpush2.bf16.xpose.msra.mxu0 0
        %1433 = vmatprep.subr.bf16.mxu0 0
        %1434 = vmatpush2.bf16.xpose.msra.mxu0 0
        %1435 = vmatprep.subr.bf16.mxu0 0
        %1436 = vmatpush2.bf16.xpose.msra.mxu0 0
        %1437 = vmatprep.mubr.bf16.mxu0 0
        %1438 = vmatmul.mubr.bf16.gmra.mxu0 %v1403
        %v1439 = vpop.f32.mrf.mxu0
        %v1440 = vadd.f32 %v1002, %v1439
        %v1441 = vpop.f32.mrf.mxu0
        %v1442 = vpop.f32.mrf.mxu0
        %v1443 = vadd.f32 %v1003, %v1442
        %v1444 = vpop.f32.mrf.mxu0
        %1445 = vdwg.mxu0
        %v1446 = vsel %vm1052, %v1440, -inf
        %1447 = vmax.xlane.f32.xlu0 %v1446
        %v1448 = vpop.xlane.xlu0 %1447
        %v1449 = vsel %vm1052, %v1443, -inf
        %1450 = vmax.xlane.f32.xlu0 %v1449
        %v1451 = vpop.xlane.xlu0 %1450
        %v1452 = vsub.f32 %v1440, %v1448
        %v1453 = vsub.f32 %v1443, %v1451
        %v1454 = vmul.f32 %v1452, 1.442695
        %v1455 = vpow.pop %v1454
        %v1456 = vmul.f32 %v1453, 1.442695
        %v1457 = vpow.pop %v1456
        %v1458 = vsel %vm1052, %v1455, 0.0
        %1459 = vadd.xlane.f32.xlu0 %v1458
        %v1460 = vpop.xlane.xlu0 %1459
        %v1461 = vsel %vm1052, %v1457, 0.0
        %1462 = vadd.xlane.f32.xlu0 %v1461
        %v1463 = vpop.xlane.xlu0 %1462
        %v1464 = vpack.c.bf16 %v1457, %v1455
        %v1466 = vsel %vm1052, %v1464, 0
        %1468 = vmatprep.subr.bf16.mxu0 0
        %1469 = vmatpush1.bf16.msra.mxu0 0
        %1470 = vmatprep.subr.bf16.mxu0 0
        %1471 = vmatpush1.bf16.msra.mxu0 0
        %1472 = vmatprep.subr.bf16.mxu0 0
        %1473 = vmatpush1.bf16.msra.mxu0 0
        %1474 = vmatprep.subr.bf16.mxu0 0
        %1475 = vmatpush1.bf16.msra.mxu0 0
        %1476 = vmatprep.subr.bf16.mxu0 0
        %1477 = vmatpush1.bf16.msra.mxu0 0
        %1478 = vmatprep.subr.bf16.mxu0 0
        %1479 = vmatpush1.bf16.msra.mxu0 0
        %1480 = vmatprep.subr.bf16.mxu0 0
        %1481 = vmatpush1.bf16.msra.mxu0 0
        %1482 = vmatprep.subr.bf16.mxu0 0
        %1483 = vmatpush1.bf16.msra.mxu0 %v1335
        %1484 = vmatprep.subr.bf16.mxu0 0
        %1485 = vmatpush2.bf16.msra.mxu0 0
        %1486 = vmatprep.subr.bf16.mxu0 0
        %1487 = vmatpush2.bf16.msra.mxu0 0
        %1488 = vmatprep.subr.bf16.mxu0 0
        %1489 = vmatpush2.bf16.msra.mxu0 0
        %1490 = vmatprep.subr.bf16.mxu0 0
        %1491 = vmatpush2.bf16.msra.mxu0 0
        %1492 = vmatprep.subr.bf16.mxu0 0
        %1493 = vmatpush2.bf16.msra.mxu0 0
        %1494 = vmatprep.subr.bf16.mxu0 0
        %1495 = vmatpush2.bf16.msra.mxu0 0
        %1496 = vmatprep.subr.bf16.mxu0 0
        %1497 = vmatpush2.bf16.msra.mxu0 0
        %1498 = vmatprep.subr.bf16.mxu0 0
        %1499 = vmatpush2.bf16.msra.mxu0 0
        %1500 = vmatprep.mubr.bf16.mxu0 0
        %1501 = vmatmul.mubr.bf16.gmra.mxu0 %v1466
        %v1502 = vpop.f32.mrf.mxu0
        %v1503 = vadd.f32 0.0, %v1502
        %v1504 = vpop.f32.mrf.mxu0
        %v1505 = vpop.f32.mrf.mxu0
        %v1506 = vadd.f32 0.0, %v1505
        %v1507 = vpop.f32.mrf.mxu0
        %1508 = vdwg.mxu0
        %v1509 = vrcp.pop %v1460
        %v1510 = vrcp.pop %v1463
        %v1511 = vmul.f32 %v1503, %v1509
        %v1512 = vmul.f32 %v1506, %v1510
        %v1513 = vpack.c.bf16 %v1512, %v1511
        %v1515 = vunpack.c.l.b16 %v1513
        %v1516 = vunpack.c.h.b16 %v1513
        %v1517 = vpack.c.b16 %v1515, %v1515
        %v1518 = vpack.c.b16 %v1516, %v1516
        %1519 = vrot.lane.b32.xlu0 %v1517, 96
        %v1520 = vpop.permute.xlu0 %1519
        %1521 = vrot.lane.b32.xlu0 %v1518, 96
        %v1522 = vpop.permute.xlu0 %1521
        %vm1525 = vcmask 1044224
        %1526 = vst.msk [vmem:[#allocation4] sm:$0xf] %vm1525, %v1520
        %1527 = vst.msk [vmem:[#allocation4 + $0x4] sm:$0xf] %vm1525, %v1522
        %v1528 = vld [vmem:[#allocation4] sm:$0xf]
        %v1529 = vld [vmem:[#allocation4 + $0x4] sm:$0xf]
        %v1530 = vld [vmem:[%s475] sm:$0xf]
        %v1531 = vld [vmem:[%s475 + $0x4] sm:$0xf]
        %v1532 = vld [vmem:[%s475 + $0x8] sm:$0xf]
        %v1533 = vld [vmem:[%s475 + $0xc] sm:$0xf]
        %v1534 = vld [vmem:[%s475 + $0x10] sm:$0xf]
        %v1535 = vld [vmem:[%s475 + $0x14] sm:$0xf]
        %v1536 = vld [vmem:[%s475 + $0x18] sm:$0xf]
        %v1537 = vld [vmem:[%s475 + $0x1c] sm:$0xf]
        %v1538 = vld [vmem:[%s475 + $0x20] sm:$0xf]
        %v1539 = vld [vmem:[%s475 + $0x24] sm:$0xf]
        %v1540 = vld [vmem:[%s475 + $0x28] sm:$0xf]
        %v1541 = vld [vmem:[%s475 + $0x2c] sm:$0xf]
        %v1542 = vld [vmem:[%s475 + $0x30] sm:$0xf]
        %v1543 = vld [vmem:[%s475 + $0x34] sm:$0xf]
        %v1544 = vld [vmem:[%s475 + $0x38] sm:$0xf]
        %v1545 = vld [vmem:[%s475 + $0x3c] sm:$0xf]
        %v1546 = vxor.u32 %v901, 2147483648
        %v1547 = vxor.u32 %v903, 2147483648
        %v1548 = vxor.u32 %v905, 2147483648
        %v1549 = vxor.u32 %v907, 2147483648
        %v1550 = vmul.f32 %v1546, 1.442695
        %v1551 = vpow.pop %v1550
        %v1552 = vmul.f32 %v1547, 1.442695
        %v1553 = vpow.pop %v1552
        %v1554 = vmul.f32 %v1548, 1.442695
        %v1555 = vpow.pop %v1554
        %v1556 = vmul.f32 %v1549, 1.442695
        %v1557 = vpow.pop %v1556
        %v1558 = vadd.f32 %v1551, 1.0
        %v1559 = vadd.f32 %v1553, 1.0
        %v1560 = vadd.f32 %v1555, 1.0
        %v1561 = vadd.f32 %v1557, 1.0
        %v1562 = vrcp.pop %v1558
        %v1563 = vmul.f32 1.0, %v1562
        %v1564 = vrcp.pop %v1559
        %v1565 = vmul.f32 1.0, %v1564
        %v1566 = vrcp.pop %v1560
        %v1567 = vmul.f32 1.0, %v1566
        %v1568 = vrcp.pop %v1561
        %v1569 = vmul.f32 1.0, %v1568
        %v1570 = vmul.f32 %v901, %v1563
        %v1571 = vmul.f32 %v903, %v1565
        %v1572 = vmul.f32 %v905, %v1567
        %v1573 = vmul.f32 %v907, %v1569
        %v1574 = vmul.f32 %v1570, %v944
        %v1575 = vmul.f32 %v1571, %v946
        %v1576 = vmul.f32 %v1572, %v948
        %v1577 = vmul.f32 %v1573, %v950
        %v1578 = vpack.c.bf16 %v1576, %v1574
        %v1579 = vpack.c.bf16 %v1577, %v1575
        %v1580 = vld [vmem:[%s480] sm:$0xf]
        %v1581 = vld [vmem:[%s480 + $0x4] sm:$0xf]
        %v1582 = vld [vmem:[%s480 + $0x8] sm:$0xf]
        %v1583 = vld [vmem:[%s480 + $0xc] sm:$0xf]
        %v1584 = vld [vmem:[%s480 + $0x10] sm:$0xf]
        %v1585 = vld [vmem:[%s480 + $0x14] sm:$0xf]
        %v1586 = vld [vmem:[%s480 + $0x18] sm:$0xf]
        %v1587 = vld [vmem:[%s480 + $0x1c] sm:$0xf]
        %v1588 = vld [vmem:[%s480 + $0x20] sm:$0xf]
        %v1589 = vld [vmem:[%s480 + $0x24] sm:$0xf]
        %v1590 = vld [vmem:[%s480 + $0x28] sm:$0xf]
        %v1591 = vld [vmem:[%s480 + $0x2c] sm:$0xf]
        %v1592 = vld [vmem:[%s480 + $0x30] sm:$0xf]
        %v1593 = vld [vmem:[%s480 + $0x34] sm:$0xf]
        %v1594 = vld [vmem:[%s480 + $0x38] sm:$0xf]
        %v1595 = vld [vmem:[%s480 + $0x3c] sm:$0xf]
        %v1596 = vld [vmem:[%s480 + $0x40] sm:$0xf]
        %v1597 = vld [vmem:[%s480 + $0x44] sm:$0xf]
        %v1598 = vld [vmem:[%s480 + $0x48] sm:$0xf]
        %v1599 = vld [vmem:[%s480 + $0x4c] sm:$0xf]
        %v1600 = vld [vmem:[%s480 + $0x50] sm:$0xf]
        %v1601 = vld [vmem:[%s480 + $0x54] sm:$0xf]
        %v1602 = vld [vmem:[%s480 + $0x58] sm:$0xf]
        %v1603 = vld [vmem:[%s480 + $0x5c] sm:$0xf]
        %v1604 = vld [vmem:[%s480 + $0x60] sm:$0xf]
        %v1605 = vld [vmem:[%s480 + $0x64] sm:$0xf]
        %v1606 = vld [vmem:[%s480 + $0x68] sm:$0xf]
        %v1607 = vld [vmem:[%s480 + $0x6c] sm:$0xf]
        %v1608 = vld [vmem:[%s480 + $0x70] sm:$0xf]
        %v1609 = vld [vmem:[%s480 + $0x74] sm:$0xf]
        %v1610 = vld [vmem:[%s480 + $0x78] sm:$0xf]
        %v1611 = vld [vmem:[%s480 + $0x7c] sm:$0xf]
        %v1644 = vunpack.c.l.b16 %v1580
        %v1645 = vunpack.c.l.b16 %v1581
        %v1646 = vunpack.c.l.b16 %v1582
        %v1647 = vunpack.c.l.b16 %v1583
        %v1648 = vunpack.c.l.b16 %v1584
        %v1649 = vunpack.c.l.b16 %v1585
        %v1650 = vunpack.c.l.b16 %v1586
        %v1651 = vunpack.c.l.b16 %v1587
        %v1652 = vunpack.c.l.b16 %v1588
        %v1653 = vunpack.c.l.b16 %v1589
        %v1654 = vunpack.c.l.b16 %v1590
        %v1655 = vunpack.c.l.b16 %v1591
        %v1656 = vunpack.c.l.b16 %v1592
        %v1657 = vunpack.c.l.b16 %v1593
        %v1658 = vunpack.c.l.b16 %v1594
        %v1659 = vunpack.c.l.b16 %v1595
        %v1660 = vunpack.c.l.b16 %v1596
        %v1661 = vunpack.c.l.b16 %v1597
        %v1662 = vunpack.c.l.b16 %v1598
        %v1663 = vunpack.c.l.b16 %v1599
        %v1664 = vunpack.c.l.b16 %v1600
        %v1665 = vunpack.c.l.b16 %v1601
        %v1666 = vunpack.c.l.b16 %v1602
        %v1667 = vunpack.c.l.b16 %v1603
        %v1668 = vunpack.c.l.b16 %v1604
        %v1669 = vunpack.c.l.b16 %v1605
        %v1670 = vunpack.c.l.b16 %v1606
        %v1671 = vunpack.c.l.b16 %v1607
        %v1672 = vunpack.c.l.b16 %v1608
        %v1673 = vunpack.c.l.b16 %v1609
        %v1674 = vunpack.c.l.b16 %v1610
        %v1675 = vunpack.c.l.b16 %v1611
        %v1676 = vpack.c.b16 %v1645, %v1644
        %v1677 = vpack.c.b16 %v1647, %v1646
        %v1678 = vpack.c.b16 %v1649, %v1648
        %v1679 = vpack.c.b16 %v1651, %v1650
        %v1680 = vpack.c.b16 %v1653, %v1652
        %v1681 = vpack.c.b16 %v1655, %v1654
        %v1682 = vpack.c.b16 %v1657, %v1656
        %v1683 = vpack.c.b16 %v1659, %v1658
        %v1684 = vpack.c.b16 %v1661, %v1660
        %v1685 = vpack.c.b16 %v1663, %v1662
        %v1686 = vpack.c.b16 %v1665, %v1664
        %v1687 = vpack.c.b16 %v1667, %v1666
        %v1688 = vpack.c.b16 %v1669, %v1668
        %v1689 = vpack.c.b16 %v1671, %v1670
        %v1690 = vpack.c.b16 %v1673, %v1672
        %v1691 = vpack.c.b16 %v1675, %v1674
        %1708 = vmatprep.subr.bf16.mxu0 0
        %1709 = vmatpush1.bf16.msra.mxu0 %v1683
        %1710 = vmatprep.subr.bf16.mxu0 0
        %1711 = vmatpush1.bf16.msra.mxu0 %v1682
        %1712 = vmatprep.subr.bf16.mxu0 0
        %1713 = vmatpush1.bf16.msra.mxu0 %v1681
        %1714 = vmatprep.subr.bf16.mxu0 0
        %1715 = vmatpush1.bf16.msra.mxu0 %v1680
        %1716 = vmatprep.subr.bf16.mxu0 0
        %1717 = vmatpush1.bf16.msra.mxu0 %v1679
        %1718 = vmatprep.subr.bf16.mxu0 0
        %1719 = vmatpush1.bf16.msra.mxu0 %v1678
        %1720 = vmatprep.subr.bf16.mxu0 0
        %1721 = vmatpush1.bf16.msra.mxu0 %v1677
        %1722 = vmatprep.subr.bf16.mxu0 0
        %1723 = vmatpush1.bf16.msra.mxu0 %v1676
        %1724 = vmatprep.subr.bf16.mxu0 0
        %1725 = vmatpush2.bf16.msra.mxu0 %v1691
        %1726 = vmatprep.subr.bf16.mxu0 0
        %1727 = vmatpush2.bf16.msra.mxu0 %v1690
        %1728 = vmatprep.subr.bf16.mxu0 0
        %1729 = vmatpush2.bf16.msra.mxu0 %v1689
        %1730 = vmatprep.subr.bf16.mxu0 0
        %1731 = vmatpush2.bf16.msra.mxu0 %v1688
        %1732 = vmatprep.subr.bf16.mxu0 0
        %1733 = vmatpush2.bf16.msra.mxu0 %v1687
        %1734 = vmatprep.subr.bf16.mxu0 0
        %1735 = vmatpush2.bf16.msra.mxu0 %v1686
        %1736 = vmatprep.subr.bf16.mxu0 0
        %1737 = vmatpush2.bf16.msra.mxu0 %v1685
        %1738 = vmatprep.subr.bf16.mxu0 0
        %1739 = vmatpush2.bf16.msra.mxu0 %v1684
        %1740 = vmatprep.mubr.bf16.mxu0 %v1579
        %1741 = vmatmul.mubr.bf16.gmra.mxu0 %v1578
        %v1742 = vpop.f32.mrf.mxu0
        %v1743 = vadd.f32 0.0, %v1742
        %v1744 = vpop.f32.mrf.mxu0
        %v1745 = vpop.f32.mrf.mxu0
        %v1746 = vadd.f32 0.0, %v1745
        %v1747 = vpop.f32.mrf.mxu0
        %1748 = vdwg.mxu0
        %v1751 = vunpack.c.l.b16 %v1528
        %v1752 = vunpack.c.l.b16 %v1529
        %v1753 = vpack.c.b16 %v1752, %v1751
        %v1771 = vunpack.c.l.b16 %v1530
        %v1772 = vunpack.c.l.b16 %v1531
        %v1773 = vunpack.c.l.b16 %v1532
        %v1774 = vunpack.c.l.b16 %v1533
        %v1775 = vunpack.c.l.b16 %v1534
        %v1776 = vunpack.c.l.b16 %v1535
        %v1777 = vunpack.c.l.b16 %v1536
        %v1778 = vunpack.c.l.b16 %v1537
        %v1779 = vunpack.c.l.b16 %v1538
        %v1780 = vunpack.c.l.b16 %v1539
        %v1781 = vunpack.c.l.b16 %v1540
        %v1782 = vunpack.c.l.b16 %v1541
        %v1783 = vunpack.c.l.b16 %v1542
        %v1784 = vunpack.c.l.b16 %v1543
        %v1785 = vunpack.c.l.b16 %v1544
        %v1786 = vunpack.c.l.b16 %v1545
        %v1787 = vpack.c.b16 %v1772, %v1771
        %v1788 = vpack.c.b16 %v1774, %v1773
        %v1789 = vpack.c.b16 %v1776, %v1775
        %v1790 = vpack.c.b16 %v1778, %v1777
        %v1791 = vpack.c.b16 %v1780, %v1779
        %v1792 = vpack.c.b16 %v1782, %v1781
        %v1793 = vpack.c.b16 %v1784, %v1783
        %v1794 = vpack.c.b16 %v1786, %v1785
        %1803 = vmatprep.subr.bf16.mxu0 0
        %1804 = vmatpush1.bf16.msra.mxu0 %v1794
        %1805 = vmatprep.subr.bf16.mxu0 0
        %1806 = vmatpush1.bf16.msra.mxu0 %v1793
        %1807 = vmatprep.subr.bf16.mxu0 0
        %1808 = vmatpush1.bf16.msra.mxu0 %v1792
        %1809 = vmatprep.subr.bf16.mxu0 0
        %1810 = vmatpush1.bf16.msra.mxu0 %v1791
        %1811 = vmatprep.subr.bf16.mxu0 0
        %1812 = vmatpush1.bf16.msra.mxu0 %v1790
        %1813 = vmatprep.subr.bf16.mxu0 0
        %1814 = vmatpush1.bf16.msra.mxu0 %v1789
        %1815 = vmatprep.subr.bf16.mxu0 0
        %1816 = vmatpush1.bf16.msra.mxu0 %v1788
        %1817 = vmatprep.subr.bf16.mxu0 0
        %1818 = vmatpush1.bf16.msra.mxu0 %v1787
        %1819 = vmatprep.subr.bf16.mxu0 0
        %1820 = vmatpush2.bf16.msra.mxu0 0
        %1821 = vmatprep.subr.bf16.mxu0 0
        %1822 = vmatpush2.bf16.msra.mxu0 0
        %1823 = vmatprep.subr.bf16.mxu0 0
        %1824 = vmatpush2.bf16.msra.mxu0 0
        %1825 = vmatprep.subr.bf16.mxu0 0
        %1826 = vmatpush2.bf16.msra.mxu0 0
        %1827 = vmatprep.subr.bf16.mxu0 0
        %1828 = vmatpush2.bf16.msra.mxu0 0
        %1829 = vmatprep.subr.bf16.mxu0 0
        %1830 = vmatpush2.bf16.msra.mxu0 0
        %1831 = vmatprep.subr.bf16.mxu0 0
        %1832 = vmatpush2.bf16.msra.mxu0 0
        %1833 = vmatprep.subr.bf16.mxu0 0
        %1834 = vmatpush2.bf16.msra.mxu0 0
        %1835 = vmatprep.mubr.bf16.mxu0 0
        %1836 = vmatmul.mubr.bf16.gmra.mxu0 %v1753
        %v1837 = vpop.f32.mrf.mxu0
        %v1838 = vadd.f32 %v1743, %v1837
        %v1839 = vpop.f32.mrf.mxu0
        %v1840 = vpop.f32.mrf.mxu0
        %v1841 = vadd.f32 %v1746, %v1840
        %v1842 = vpop.f32.mrf.mxu0
        %1843 = vdwg.mxu0
        %1844 = vst [vmem:[#allocation2] sm:$0xff] %v1838
        %1845 = vst [vmem:[#allocation2 + $0x8] sm:$0xff] %v1841
        %p1846 = scmp.eq.s32.totalorder %s25, 1
        // Predicated region
        $region77: #{cohere_model_forward.1} parent=71 // pred_check
          %p1847 = pneg %p1846
        $region78: #{cohere_model_forward.1} parent=71 // pred_check_branch
          %1849 = sbr.rel (%p1847) target = $region80
        $region79: #{cohere_model_forward.1} parent=71 // pred_region
          %v1850 = vadd.f32 %v1838, %v498
          %v1851 = vadd.f32 %v1841, %v499
          %v1852 = vld [vmem:[%s12] sm:$0x1]
          %1853 = vadd.xlane.f32.xlu0 %v1850
          %v1854 = vpop.xlane.xlu0 %1853
          %1855 = vadd.xlane.f32.xlu0 %v1851
          %v1856 = vpop.xlane.xlu0 %1855
          %v1857 = vmul.f32 %v1854, %v507
          %v1858 = vmul.f32 %v1856, %v507
          %v1859 = vsub.f32 %v1850, %v1857
          %v1860 = vsub.f32 %v1851, %v1858
          %v1861 = vmul.f32 %v1859, %v1859
          %v1862 = vmul.f32 %v1860, %v1860
          %1863 = vadd.xlane.f32.xlu0 %v1861
          %v1864 = vpop.xlane.xlu0 %1863
          %1865 = vadd.xlane.f32.xlu0 %v1862
          %v1866 = vpop.xlane.xlu0 %1865
          %v1867 = vmul.f32 %v1864, %v507
          %v1868 = vmul.f32 %v1866, %v507
          %v1869 = vadd.f32 %v1867, 1e-05
          %v1870 = vadd.f32 %v1868, 1e-05
          %v1871 = vrsqrt.pop %v1869
          %v1872 = vrsqrt.pop %v1870
          %v1873 = vmul.f32 %v1859, %v1871
          %v1874 = vmul.f32 %v1860, %v1872
          %v1876 = vlaneseq
          %v1877 = vshrl.u32 %v1876, 7
          %v1878 = vsub.s32 0, %v1877
          %v1879 = vrot.slane %v1852, %v1878
          %v1881 = vmul.f32 %v1873, %v1879
          %v1882 = vmul.f32 %v1874, %v1879
          %v1883 = vpack.c.bf16 %v1882, %v1881
          %v1885 = vunpack.c.l.b16 %v1883
          %v1886 = vunpack.c.h.b16 %v1883
          %v1887 = vpack.c.b16 %v1885, %v1885
          %v1888 = vpack.c.b16 %v1886, %v1886
          %1891 = vst [vmem:[#allocation5] sm:$0xf] %v1887
          %1892 = vst [vmem:[#allocation5 + $0x4] sm:$0xf] %v1888
        $region80: #{cohere_model_forward.1} parent=71 // pred_fallthru
          _
        // Predicated region
        $region81: #{cohere_model_forward.1} parent=71 // pred_check
          %p1893 = pneg %p331
        $region82: #{cohere_model_forward.1} parent=71 // pred_check_branch
          %1895 = sbr.rel (%p1893) target = $region84
        $region83: #{cohere_model_forward.1} parent=71 // pred_region
          %s1897 = ssub.s32 128, 128
          %1898 = vsyncadd [#allocation6], %s1897
          %s1899 = sshll.u32 [#allocation5], 4
          %s1900 = int_to_ptr.vmem [resolvable:$true] %s1899
          %1905 = dma.vmem_to_hbm [thread:$0]  %s1900, 128, %s13, [#allocation6], 64, 64, 4
        $region84: #{cohere_model_forward.1} parent=71 // pred_fallthru
          _
        // Predicated region
        $region85: #{cohere_model_forward.1} parent=71 // pred_check
          %p1906 = pneg %p331
        $region86: #{cohere_model_forward.1} parent=71 // pred_check_branch
          %1908 = sbr.rel (%p1906) target = $region88
        $region87: #{cohere_model_forward.1} parent=71 // pred_region
          %1909 = dma.done [#allocation6], 128
        $region88: #{cohere_model_forward.1} parent=71 // pred_fallthru
          _
      $region72: #{cohere_model_forward.1} parent=5 // pred_fallthru
        _
      %p1910 = scmp.le.s32.totalorder 2, %s20
      // Predicated region
      $region89: #{cohere_model_forward.1} parent=5 // pred_check
        %p1911 = pneg %p1910
      $region90: #{cohere_model_forward.1} parent=5 // pred_check_branch
        %1913 = sbr.rel (%p1911) target = $region92
      $region91: #{cohere_model_forward.1} parent=5 // pred_region
        %s1914 = ssub.s32 %s20, 2
      $region92: #{cohere_model_forward.1} parent=5 // pred_fallthru
        _
    $region6: #{cohere_model_forward.1} parent=1 // loop_footer
      %s24 = sadd.s32 1, %s20
    $region7: #{cohere_model_forward.1} parent=1 // loop_footer_branch
      %19 = sbr.rel target = $region3
    $region8: #{cohere_model_forward.1} parent=1 // loop_exit
      _
    %1915 = vsyncpa [#allocation6], 1
    %s1916 = scalar_lea.sflag [#allocation6], 1
    %1917 = vsyncpa %s1916, 1

</llo_original>
